<compile_context>
chip_gen: v7x
topology: tpu7x:2x2x1
jax: 0.10.0
libtpu: 0.0.40
codegen_flags: <defaults>
</compile_context>

<pallas_src>
import numpy as np
import jax
import jax.numpy as jnp
from jax.experimental import pallas as pl
from jax.experimental.pallas import tpu as pltpu

CIN, KH, KW = 3, 2, 2
POOL_K, POOL_S, POOL_P = 3, 2, 3


def _pool_matrix(n_in, n_out):
    """(n_out, n_in) matrix with 1/count entries (count_include_pad=False)."""
    m = np.zeros((n_out, n_in), np.float32)
    for o in range(n_out):
        start = o * POOL_S - POOL_P
        idx = [i for i in range(start, start + POOL_K) if 0 <= i < n_in]
        for i in idx:
            m[o, i] = 1.0 / len(idx)
    return m


def make_kernel(H, W):
    Hc, Wc = H - (KH - 1), W - (KW - 1)

    def kernel(x_ref, w_ref, b_ref, ph_ref, pw_ref, o_ref):
        # x_ref : (CIN, H, W)   VMEM  one image, native NCHW; W on lanes
        # w_ref : (CIN*KH*KW,)  SMEM  flattened conv weights [c, di, dj]
        # b_ref : (1,)          SMEM  conv bias
        # ph_ref: (OH, Hc)      VMEM  H-pool matrix (1/row_count entries)
        # pw_ref: (Wc, OW)      VMEM  W-pool matrix (1/col_count entries)
        # o_ref : (OH, OW)      VMEM

        # ---- Conv2d(3 -> 1, 2x2, stride 1, valid) ----
        # Per-dj partials accumulated over channels/di using sublane slices
        # only; the single dj=1 lane shift is applied once at the end.
        a0 = jnp.zeros((Hc, W), jnp.float32)
        a1 = jnp.zeros((Hc, W), jnp.float32)
        for c in range(CIN):
            xc = x_ref[c]                      # (H, W); one channel live
            top = xc[0:Hc, :]                  # rows i
            bot = xc[1:H, :]                   # rows i+1
            a0 = a0 + w_ref[c * 4 + 0] * top + w_ref[c * 4 + 2] * bot
            a1 = a1 + w_ref[c * 4 + 1] * top + w_ref[c * 4 + 3] * bot
        v1 = b_ref[0] + a0[:, 0:Wc] + a1[:, 1:W]          # (Hc, Wc)

        # ---- elementwise chain (tanh-GELU form) ----
        v2 = v1 * 0.5
        v7 = (v1 + 0.044715 * (v1 * v1 * v1)) * 0.7978845608028654
        v10 = v2 * (jnp.tanh(v7) + 1.0)                   # (Hc, Wc)

        # ---- AvgPool2d(3, stride=2, pad=3, count_include_pad=False) ----
        # Separable pool as two MXU matmuls; reciprocal counts folded into the
        # constant pooling matrices (count==0 windows -> 0 automatically).
        hp = jnp.dot(ph_ref[...], v10,
                     preferred_element_type=jnp.float32,
                     precision=jax.lax.Precision.HIGHEST)        # (OH, Wc)
        o_ref[...] = jnp.dot(hp, pw_ref[...],
                             preferred_element_type=jnp.float32,
                             precision=jax.lax.Precision.HIGHEST)  # (OH, OW)

    return kernel


def model_forward(x, w, b):
    x = jnp.asarray(x, jnp.float32)
    N, C, H, W = x.shape
    assert C == CIN
    Hc, Wc = H - (KH - 1), W - (KW - 1)
    OH = (Hc + 2 * POOL_P - POOL_K) // POOL_S + 1
    OW = (Wc + 2 * POOL_P - POOL_K) // POOL_S + 1

    w_flat = jnp.asarray(w, jnp.float32).reshape(-1)      # (CIN*KH*KW,)
    b_flat = jnp.asarray(b, jnp.float32).reshape(-1)      # (1,)
    ph = jnp.asarray(_pool_matrix(Hc, OH))                # (OH, Hc)
    pw = jnp.asarray(_pool_matrix(Wc, OW).T)              # (Wc, OW)

    kernel = make_kernel(H, W)

    out = pl.pallas_call(
        kernel,
        out_shape=jax.ShapeDtypeStruct((N, 1, OH, OW), jnp.float32),
        grid=(N,),
        in_specs=[
            # Native NCHW input, one contiguous image per grid step.
            pl.BlockSpec((None, C, H, W), lambda n: (n, 0, 0, 0)),
            pl.BlockSpec(memory_space=pltpu.MemorySpace.SMEM),   # conv weights
            pl.BlockSpec(memory_space=pltpu.MemorySpace.SMEM),   # conv bias
            # Constant pooling matrices: same block every step -> stay resident.
            pl.BlockSpec((OH, Hc), lambda n: (0, 0)),
            pl.BlockSpec((Wc, OW), lambda n: (0, 0)),
        ],
        out_specs=pl.BlockSpec((None, None, OH, OW), lambda n: (n, 0, 0, 0)),
        compiler_params=pltpu.CompilerParams(
            dimension_semantics=("parallel",)),
    )(x, w_flat, b_flat, ph, pw)
    return out


def ref_forward_np(x, w, b):
    """Vectorized numpy reference (f64) with identical semantics (count-0 -> 0)."""
    x = np.asarray(x, np.float64)
    w = np.asarray(w, np.float64)
    b = np.asarray(b, np.float64)
    N, C, H, W = x.shape
    Hc, Wc = H - 1, W - 1
    v1 = np.zeros((N, Hc, Wc)) + b[0]
    for c in range(C):
        for di in range(KH):
            for dj in range(KW):
                v1 += w[0, c, di, dj] * x[:, c, di:di + Hc, dj:dj + Wc]
    v2 = v1 * 0.5
    v7 = (v1 + 0.044715 * v1 ** 3) * 0.7978845608028654
    v10 = v2 * (np.tanh(v7) + 1.0)
    OH = (Hc + 2 * POOL_P - POOL_K) // POOL_S + 1
    OW = (Wc + 2 * POOL_P - POOL_K) // POOL_S + 1
    out = np.zeros((N, OH, OW))
    for oh in range(OH):
        hs = oh * POOL_S - POOL_P
        h0, h1 = max(hs, 0), min(hs + POOL_K, Hc)
        for ow in range(OW):
            ws = ow * POOL_S - POOL_P
            w0, w1 = max(ws, 0), min(ws + POOL_K, Wc)
            cnt = max(h1 - h0, 0) * max(w1 - w0, 0)
            if cnt > 0:
                out[:, oh, ow] = v10[:, h0:h1, w0:w1].sum(axis=(1, 2)) / cnt
    return out[:, None, :, :].astype(np.float32)


if __name__ == "__main__":
    key = jax.random.PRNGKey(0)
    kx, kw, kb = jax.random.split(key, 3)

    # Small shapes consistent with the module (conv needs 3 input channels);
    # W = 128 keeps the lane axis full, mirroring the spec's (1, 3, 257, 256).
    N, C, H, W = 2, 3, 33, 128
    x = jax.random.normal(kx, (N, C, H, W), dtype=jnp.float32)
    # Conv2d(3, 1, 2): weight (1, 3, 2, 2), bias (1,)
    w = jax.random.normal(kw, (1, CIN, KH, KW), dtype=jnp.float32) * 0.3
    b = jax.random.normal(kb, (1,), dtype=jnp.float32) * 0.1

    out = jax.block_until_ready(model_forward(x, w, b))

    ref = ref_forward_np(np.asarray(x), np.asarray(w), np.asarray(b))
    np.testing.assert_allclose(np.asarray(out), ref, rtol=1e-4, atol=1e-4)

    print("KERNEL_OK")
</pallas_src>

<mosaic_0001>
module attributes {stable_mosaic.version = 11 : i64} {
  func.func @kernel(%arg0: i32, %arg1: memref<1x3x33x128xf32, #tpu.memory_space<vmem>>, %arg2: memref<12xf32, #tpu.memory_space<smem>>, %arg3: memref<1xf32, #tpu.memory_space<smem>>, %arg4: memref<18x32xf32, #tpu.memory_space<vmem>>, %arg5: memref<127x66xf32, #tpu.memory_space<vmem>>, %arg6: memref<1x1x18x66xf32, #tpu.memory_space<vmem>>) attributes {dimension_semantics = [#tpu.dimension_semantics<parallel>], iteration_bounds = array<i64: 2>, scalar_prefetch = 0 : i64, scratch_operands = 0 : i64, tpu.core_type = #tpu.core_type<tc>, window_params = [{transform_indices = @transform_0, window_bounds = array<i64: 1, 3, 33, 128>}, {transform_indices = @transform_1, window_bounds = array<i64: 12>}, {transform_indices = @transform_2, window_bounds = array<i64: 1>}, {pipeline_mode = #tpu.pipeline_mode<synchronous>, transform_indices = @transform_3, window_bounds = array<i64: 18, 32>}, {pipeline_mode = #tpu.pipeline_mode<synchronous>, transform_indices = @transform_4, window_bounds = array<i64: 127, 66>}, {transform_indices = @transform_5, window_bounds = array<i64: 1, 1, 18, 66>}]} {
    %cst = arith.constant 0.000000e+00 : f32
    %0 = vector.broadcast %cst : f32 to vector<32x128xf32>
    %cst_0 = arith.constant 0.000000e+00 : f32
    %1 = vector.broadcast %cst_0 : f32 to vector<32x128xf32>
    %c0 = arith.constant 0 : index
    %c0_1 = arith.constant 0 : index
    %c0_2 = arith.constant 0 : index
    %c0_3 = arith.constant 0 : index
    %2 = vector.load %arg1[%c0, %c0_1, %c0_2, %c0_3] : memref<1x3x33x128xf32, #tpu.memory_space<vmem>>, vector<1x1x33x128xf32>
    %3 = vector.shape_cast %2 : vector<1x1x33x128xf32> to vector<33x128xf32>
    %4 = vector.extract_strided_slice %3 {offsets = [0, 0], sizes = [32, 128], strides = [1, 1]} : vector<33x128xf32> to vector<32x128xf32>
    %5 = vector.extract_strided_slice %3 {offsets = [1, 0], sizes = [32, 128], strides = [1, 1]} : vector<33x128xf32> to vector<32x128xf32>
    %c0_4 = arith.constant 0 : index
    %6 = memref.load %arg2[%c0_4] : memref<12xf32, #tpu.memory_space<smem>>
    %7 = vector.broadcast %6 : f32 to vector<32x128xf32>
    %8 = arith.mulf %7, %4 : vector<32x128xf32>
    %9 = arith.addf %0, %8 : vector<32x128xf32>
    %c2 = arith.constant 2 : index
    %10 = memref.load %arg2[%c2] : memref<12xf32, #tpu.memory_space<smem>>
    %11 = vector.broadcast %10 : f32 to vector<32x128xf32>
    %12 = arith.mulf %11, %5 : vector<32x128xf32>
    %13 = arith.addf %9, %12 : vector<32x128xf32>
    %c1 = arith.constant 1 : index
    %14 = memref.load %arg2[%c1] : memref<12xf32, #tpu.memory_space<smem>>
    %15 = vector.broadcast %14 : f32 to vector<32x128xf32>
    %16 = arith.mulf %15, %4 : vector<32x128xf32>
    %17 = arith.addf %1, %16 : vector<32x128xf32>
    %c3 = arith.constant 3 : index
    %18 = memref.load %arg2[%c3] : memref<12xf32, #tpu.memory_space<smem>>
    %19 = vector.broadcast %18 : f32 to vector<32x128xf32>
    %20 = arith.mulf %19, %5 : vector<32x128xf32>
    %21 = arith.addf %17, %20 : vector<32x128xf32>
    %c0_5 = arith.constant 0 : index
    %c1_6 = arith.constant 1 : index
    %c0_7 = arith.constant 0 : index
    %c0_8 = arith.constant 0 : index
    %22 = vector.load %arg1[%c0_5, %c1_6, %c0_7, %c0_8] : memref<1x3x33x128xf32, #tpu.memory_space<vmem>>, vector<1x1x33x128xf32>
    %23 = vector.shape_cast %22 : vector<1x1x33x128xf32> to vector<33x128xf32>
    %24 = vector.extract_strided_slice %23 {offsets = [0, 0], sizes = [32, 128], strides = [1, 1]} : vector<33x128xf32> to vector<32x128xf32>
    %25 = vector.extract_strided_slice %23 {offsets = [1, 0], sizes = [32, 128], strides = [1, 1]} : vector<33x128xf32> to vector<32x128xf32>
    %c4 = arith.constant 4 : index
    %26 = memref.load %arg2[%c4] : memref<12xf32, #tpu.memory_space<smem>>
    %27 = vector.broadcast %26 : f32 to vector<32x128xf32>
    %28 = arith.mulf %27, %24 : vector<32x128xf32>
    %29 = arith.addf %13, %28 : vector<32x128xf32>
    %c6 = arith.constant 6 : index
    %30 = memref.load %arg2[%c6] : memref<12xf32, #tpu.memory_space<smem>>
    %31 = vector.broadcast %30 : f32 to vector<32x128xf32>
    %32 = arith.mulf %31, %25 : vector<32x128xf32>
    %33 = arith.addf %29, %32 : vector<32x128xf32>
    %c5 = arith.constant 5 : index
    %34 = memref.load %arg2[%c5] : memref<12xf32, #tpu.memory_space<smem>>
    %35 = vector.broadcast %34 : f32 to vector<32x128xf32>
    %36 = arith.mulf %35, %24 : vector<32x128xf32>
    %37 = arith.addf %21, %36 : vector<32x128xf32>
    %c7 = arith.constant 7 : index
    %38 = memref.load %arg2[%c7] : memref<12xf32, #tpu.memory_space<smem>>
    %39 = vector.broadcast %38 : f32 to vector<32x128xf32>
    %40 = arith.mulf %39, %25 : vector<32x128xf32>
    %41 = arith.addf %37, %40 : vector<32x128xf32>
    %c0_9 = arith.constant 0 : index
    %c2_10 = arith.constant 2 : index
    %c0_11 = arith.constant 0 : index
    %c0_12 = arith.constant 0 : index
    %42 = vector.load %arg1[%c0_9, %c2_10, %c0_11, %c0_12] : memref<1x3x33x128xf32, #tpu.memory_space<vmem>>, vector<1x1x33x128xf32>
    %43 = vector.shape_cast %42 : vector<1x1x33x128xf32> to vector<33x128xf32>
    %44 = vector.extract_strided_slice %43 {offsets = [0, 0], sizes = [32, 128], strides = [1, 1]} : vector<33x128xf32> to vector<32x128xf32>
    %45 = vector.extract_strided_slice %43 {offsets = [1, 0], sizes = [32, 128], strides = [1, 1]} : vector<33x128xf32> to vector<32x128xf32>
    %c8 = arith.constant 8 : index
    %46 = memref.load %arg2[%c8] : memref<12xf32, #tpu.memory_space<smem>>
    %47 = vector.broadcast %46 : f32 to vector<32x128xf32>
    %48 = arith.mulf %47, %44 : vector<32x128xf32>
    %49 = arith.addf %33, %48 : vector<32x128xf32>
    %c10 = arith.constant 10 : index
    %50 = memref.load %arg2[%c10] : memref<12xf32, #tpu.memory_space<smem>>
    %51 = vector.broadcast %50 : f32 to vector<32x128xf32>
    %52 = arith.mulf %51, %45 : vector<32x128xf32>
    %53 = arith.addf %49, %52 : vector<32x128xf32>
    %c9 = arith.constant 9 : index
    %54 = memref.load %arg2[%c9] : memref<12xf32, #tpu.memory_space<smem>>
    %55 = vector.broadcast %54 : f32 to vector<32x128xf32>
    %56 = arith.mulf %55, %44 : vector<32x128xf32>
    %57 = arith.addf %41, %56 : vector<32x128xf32>
    %c11 = arith.constant 11 : index
    %58 = memref.load %arg2[%c11] : memref<12xf32, #tpu.memory_space<smem>>
    %59 = vector.broadcast %58 : f32 to vector<32x128xf32>
    %60 = arith.mulf %59, %45 : vector<32x128xf32>
    %61 = arith.addf %57, %60 : vector<32x128xf32>
    %c0_13 = arith.constant 0 : index
    %62 = memref.load %arg3[%c0_13] : memref<1xf32, #tpu.memory_space<smem>>
    %63 = vector.extract_strided_slice %53 {offsets = [0, 0], sizes = [32, 127], strides = [1, 1]} : vector<32x128xf32> to vector<32x127xf32>
    %64 = vector.broadcast %62 : f32 to vector<32x127xf32>
    %65 = arith.addf %64, %63 : vector<32x127xf32>
    %66 = vector.extract_strided_slice %61 {offsets = [0, 1], sizes = [32, 127], strides = [1, 1]} : vector<32x128xf32> to vector<32x127xf32>
    %67 = arith.addf %65, %66 : vector<32x127xf32>
    %cst_14 = arith.constant 5.000000e-01 : f32
    %68 = vector.broadcast %cst_14 : f32 to vector<32x127xf32>
    %69 = arith.mulf %67, %68 : vector<32x127xf32>
    %70 = arith.mulf %67, %67 : vector<32x127xf32>
    %71 = arith.mulf %70, %67 : vector<32x127xf32>
    %cst_15 = arith.constant 4.471500e-02 : f32
    %72 = vector.broadcast %cst_15 : f32 to vector<32x127xf32>
    %73 = arith.mulf %72, %71 : vector<32x127xf32>
    %74 = arith.addf %67, %73 : vector<32x127xf32>
    %cst_16 = arith.constant 0.797884583 : f32
    %75 = vector.broadcast %cst_16 : f32 to vector<32x127xf32>
    %76 = arith.mulf %74, %75 : vector<32x127xf32>
    %77 = math.tanh %76 : vector<32x127xf32>
    %cst_17 = arith.constant 1.000000e+00 : f32
    %78 = vector.broadcast %cst_17 : f32 to vector<32x127xf32>
    %79 = arith.addf %77, %78 : vector<32x127xf32>
    %80 = arith.mulf %69, %79 : vector<32x127xf32>
    %c0_18 = arith.constant 0 : index
    %c0_19 = arith.constant 0 : index
    %81 = vector.load %arg4[%c0_18, %c0_19] : memref<18x32xf32, #tpu.memory_space<vmem>>, vector<18x32xf32>
    %cst_20 = arith.constant dense<0.000000e+00> : vector<18x127xf32>
    %82 = tpu.matmul %81, %80, %cst_20 {dimension_numbers = #tpu.dot_dimension_numbers<[1], [0], [0], [1], [0, 0, 1, 1], [], []>, precision = #tpu.contract_precision<fp32>} : vector<18x32xf32>, vector<32x127xf32>, vector<18x127xf32> -> vector<18x127xf32>
    %c0_21 = arith.constant 0 : index
    %c0_22 = arith.constant 0 : index
    %83 = vector.load %arg5[%c0_21, %c0_22] : memref<127x66xf32, #tpu.memory_space<vmem>>, vector<127x66xf32>
    %cst_23 = arith.constant dense<0.000000e+00> : vector<18x66xf32>
    %84 = tpu.matmul %82, %83, %cst_23 {dimension_numbers = #tpu.dot_dimension_numbers<[1], [0], [0], [1], [0, 0, 1, 1], [], []>, precision = #tpu.contract_precision<fp32>} : vector<18x127xf32>, vector<127x66xf32>, vector<18x66xf32> -> vector<18x66xf32>
    %c0_24 = arith.constant 0 : index
    %c0_25 = arith.constant 0 : index
    %c0_26 = arith.constant 0 : index
    %c0_27 = arith.constant 0 : index
    %85 = vector.load %arg6[%c0_24, %c0_25, %c0_26, %c0_27] : memref<1x1x18x66xf32, #tpu.memory_space<vmem>>, vector<1x1x18x66xf32>
    %86 = vector.shape_cast %85 : vector<1x1x18x66xf32> to vector<18x66xf32>
    %87 = vector.shape_cast %84 : vector<18x66xf32> to vector<1x1x18x66xf32>
    tpu.vector_store %arg6[%c0_24, %c0_25, %c0_26, %c0_27], %87 {strides = array<i32>} : memref<1x1x18x66xf32, #tpu.memory_space<vmem>>, vector<1x1x18x66xf32>,
    return
  }
  func.func @transform_0(%arg0: i32) -> (i32, i32, i32, i32) {
    %c0_i32 = arith.constant 0 : i32
    %c0_i32_0 = arith.constant 0 : i32
    %c0_i32_1 = arith.constant 0 : i32
    %c0_i32_2 = arith.constant 0 : i32
    return %arg0, %c0_i32, %c0_i32_0, %c0_i32_1 : i32, i32, i32, i32
  }
  func.func @transform_1(%arg0: i32) -> i32 {
    %c0_i32 = arith.constant 0 : i32
    %c0_i32_0 = arith.constant 0 : i32
    return %c0_i32 : i32
  }
  func.func @transform_2(%arg0: i32) -> i32 {
    %c0_i32 = arith.constant 0 : i32
    %c0_i32_0 = arith.constant 0 : i32
    return %c0_i32 : i32
  }
  func.func @transform_3(%arg0: i32) -> (i32, i32) {
    %c0_i32 = arith.constant 0 : i32
    %c0_i32_0 = arith.constant 0 : i32
    %c0_i32_1 = arith.constant 0 : i32
    return %c0_i32, %c0_i32_0 : i32, i32
  }
  func.func @transform_4(%arg0: i32) -> (i32, i32) {
    %c0_i32 = arith.constant 0 : i32
    %c0_i32_0 = arith.constant 0 : i32
    %c0_i32_1 = arith.constant 0 : i32
    return %c0_i32, %c0_i32_0 : i32, i32
  }
  func.func @transform_5(%arg0: i32) -> (i32, i32, i32, i32) {
    %c0_i32 = arith.constant 0 : i32
    %c0_i32_0 = arith.constant 0 : i32
    %c0_i32_1 = arith.constant 0 : i32
    %c0_i32_2 = arith.constant 0 : i32
    return %arg0, %c0_i32, %c0_i32_0, %c0_i32_1 : i32, i32, i32, i32
  }
}

</mosaic_0001>

<llo_original>
// kernel: tpu_custom_call.1
$region0: #{tpu_custom_call.1}
  #allocation0 [shape = 'u32[]', space=smem, size = 0x4, offset = 0x4, fixed_abs, tag = 'smem constant byte address 0x4 - core index']
  #allocation1 [shape = 'u32[144,128]{1,0:T(1,128)}', space=vmem, size = 0x12000, scoped, tag = 'internal scratch']
  #allocation2 [shape = 'f32[1]{0:T(128)S(6)}', space=smem, size = 0x200, scoped, tag = 'scoped memory for tpu_custom_call.1']
  %s0 = inlined_call_operand.vmem [shape: f32[2,3,33,128], index: 0, kind: input, shape index: {}]
  %s1 = inlined_call_operand.vmem [shape: f32[12], index: 1, kind: input, shape index: {}]
  %s2 = inlined_call_operand.<no memory space> [shape: f32[1], index: 2, kind: input, shape index: {}]
  %s3 = inlined_call_operand.vmem [shape: f32[18,32], index: 3, kind: input, shape index: {}]
  %s4 = inlined_call_operand.vmem [shape: f32[127,66], index: 4, kind: input, shape index: {}]
  %s5 = inlined_call_operand.vmem [shape: f32[2,1,18,66], index: 5, kind: output, shape index: {}]
  %s6 = sld [smem:[#allocation0]]
  $region57: #{tpu_custom_call.1} parent=0
    _
  %s8 = ssub.s32 1, %s6
  %s9 = scalar_select 0, %s8, %s6
  %10 = sst [smem:[#allocation2]] %s2
  $region1: #{tpu_custom_call.1} parent=0
    #allocation3 [shape = 'u8[512]{0}', space=smem, size = 0x200, scoped, tag = 'input window, operand 1, single buffered']
    #allocation4 [shape = 's32[2]{0}', space=sflag, size = 0x8, scoped, tag = 'scoped memory for tpu_custom_call.1']
    %11 = vsyncpa [#allocation4], 0
    loop: start=0, step=1, limit=4
    $region2: #{tpu_custom_call.1} parent=1 // loop_pre_header
      _
    $region3: #{tpu_custom_call.1} parent=1 // loop_header
      %s13 = sphi 0, %s17
      %p14 = scmp.ge.s32.totalorder %s13, 4
      %s23 = sphi 0, %s25
      %s26 = sphi 0, %s23
      %s27 = sphi 0, %s26
      %s43 = sphi 0, %s27
      %s47 = sphi 0, %s47
      %s49 = sphi 0, %s47
      %s50 = sphi 0, %s49
      %s64 = sphi 0, %s50
      %s68 = sphi 0, %s68
      %s70 = sphi 0, %s68
      %s71 = sphi 0, %s70
      %s85 = sphi 0, %s71
      %s89 = sphi 0, %s89
      %s91 = sphi 0, %s89
      %s92 = sphi 0, %s91
      %s106 = sphi 0, %s92
      %s110 = sphi 0, %s110
      %s112 = sphi 0, %s110
      %s113 = sphi 0, %s112
      %s127 = sphi 0, %s113
      %s133 = sphi 0, %s135
      %s136 = sphi 0, %s133
      %s137 = sphi 0, %s136
      %s153 = sphi 0, %s137
    $region4: #{tpu_custom_call.1} parent=1 // loop_header_branch
      %16 = sbr.rel (%p14) target = $region8
    $region5: #{tpu_custom_call.1} parent=1 // loop_body
      %s18 = ssub.s32 %s13, 1
      %s19 = ssub.s32 %s13, 2
      %s20 = sadd.s32 %s13, 1
      %s21 = ssub.s32 %s13, %s20
      %p22 = scmp.eq.s32.totalorder %s21, 0
      %s24 = sadd.s32 %s23, 1
      %s25 = scalar_select %p22, %s23, %s24
      %p28 = pneg %p22
      %p29 = scmp.eq.s32.totalorder %s13, 1
      %p30 = por %p28, %p29
      %p31 = scmp.ne.s32.totalorder %s23, %s26
      %p32 = scmp.eq.s32.totalorder %s13, 0
      %p33 = por %p31, %p32
      %p34 = scmp.ne.s32.totalorder %s23, %s26
      %p35 = scmp.eq.s32.totalorder %s18, 1
      %p36 = por %p34, %p35
      %p37 = scmp.ne.s32.totalorder %s26, %s27
      %p38 = scmp.eq.s32.totalorder %s18, 0
      %p39 = por %p37, %p38
      %p40 = scmp.ne.s32.totalorder %s26, %s27
      %p41 = scmp.eq.s32.totalorder %s19, 1
      %p42 = por %p40, %p41
      %p44 = scmp.ne.s32.totalorder %s27, %s43
      %p45 = scmp.eq.s32.totalorder %s19, 0
      %p46 = por %p44, %p45
      %s48 = sadd.s32 %s47, 1
      %p51 = scmp.eq.s32.totalorder %s13, 1
      %p52 = scmp.ne.s32.totalorder %s47, %s49
      %p53 = scmp.eq.s32.totalorder %s13, 0
      %p54 = por %p52, %p53
      %p55 = scmp.ne.s32.totalorder %s47, %s49
      %p56 = scmp.eq.s32.totalorder %s18, 1
      %p57 = por %p55, %p56
      %p58 = scmp.ne.s32.totalorder %s49, %s50
      %p59 = scmp.eq.s32.totalorder %s18, 0
      %p60 = por %p58, %p59
      %p61 = scmp.ne.s32.totalorder %s49, %s50
      %p62 = scmp.eq.s32.totalorder %s19, 1
      %p63 = por %p61, %p62
      %p65 = scmp.ne.s32.totalorder %s50, %s64
      %p66 = scmp.eq.s32.totalorder %s19, 0
      %p67 = por %p65, %p66
      %s69 = sadd.s32 %s68, 1
      %p72 = scmp.eq.s32.totalorder %s13, 1
      %p73 = scmp.ne.s32.totalorder %s68, %s70
      %p74 = scmp.eq.s32.totalorder %s13, 0
      %p75 = por %p73, %p74
      %p76 = scmp.ne.s32.totalorder %s68, %s70
      %p77 = scmp.eq.s32.totalorder %s18, 1
      %p78 = por %p76, %p77
      %p79 = scmp.ne.s32.totalorder %s70, %s71
      %p80 = scmp.eq.s32.totalorder %s18, 0
      %p81 = por %p79, %p80
      %p82 = scmp.ne.s32.totalorder %s70, %s71
      %p83 = scmp.eq.s32.totalorder %s19, 1
      %p84 = por %p82, %p83
      %p86 = scmp.ne.s32.totalorder %s71, %s85
      %p87 = scmp.eq.s32.totalorder %s19, 0
      %p88 = por %p86, %p87
      %s90 = sadd.s32 %s89, 1
      %p93 = scmp.eq.s32.totalorder %s13, 1
      %p94 = scmp.ne.s32.totalorder %s89, %s91
      %p95 = scmp.eq.s32.totalorder %s13, 0
      %p96 = por %p94, %p95
      %p97 = scmp.ne.s32.totalorder %s89, %s91
      %p98 = scmp.eq.s32.totalorder %s18, 1
      %p99 = por %p97, %p98
      %p100 = scmp.ne.s32.totalorder %s91, %s92
      %p101 = scmp.eq.s32.totalorder %s18, 0
      %p102 = por %p100, %p101
      %p103 = scmp.ne.s32.totalorder %s91, %s92
      %p104 = scmp.eq.s32.totalorder %s19, 1
      %p105 = por %p103, %p104
      %p107 = scmp.ne.s32.totalorder %s92, %s106
      %p108 = scmp.eq.s32.totalorder %s19, 0
      %p109 = por %p107, %p108
      %s111 = sadd.s32 %s110, 1
      %p114 = scmp.eq.s32.totalorder %s13, 1
      %p115 = scmp.ne.s32.totalorder %s110, %s112
      %p116 = scmp.eq.s32.totalorder %s13, 0
      %p117 = por %p115, %p116
      %p118 = scmp.ne.s32.totalorder %s110, %s112
      %p119 = scmp.eq.s32.totalorder %s18, 1
      %p120 = por %p118, %p119
      %p121 = scmp.ne.s32.totalorder %s112, %s113
      %p122 = scmp.eq.s32.totalorder %s18, 0
      %p123 = por %p121, %p122
      %p124 = scmp.ne.s32.totalorder %s112, %s113
      %p125 = scmp.eq.s32.totalorder %s19, 1
      %p126 = por %p124, %p125
      %p128 = scmp.ne.s32.totalorder %s113, %s127
      %p129 = scmp.eq.s32.totalorder %s19, 0
      %p130 = por %p128, %p129
      %s131 = ssub.s32 %s13, %s20
      %p132 = scmp.eq.s32.totalorder %s131, 0
      %s134 = sadd.s32 %s133, 1
      %s135 = scalar_select %p132, %s133, %s134
      %p138 = pneg %p132
      %p139 = scmp.eq.s32.totalorder %s13, 1
      %p140 = por %p138, %p139
      %p141 = scmp.ne.s32.totalorder %s133, %s136
      %p142 = scmp.eq.s32.totalorder %s13, 0
      %p143 = por %p141, %p142
      %p144 = scmp.ne.s32.totalorder %s133, %s136
      %p145 = scmp.eq.s32.totalorder %s18, 1
      %p146 = por %p144, %p145
      %p147 = scmp.ne.s32.totalorder %s136, %s137
      %p148 = scmp.eq.s32.totalorder %s18, 0
      %p149 = por %p147, %p148
      %p150 = scmp.ne.s32.totalorder %s136, %s137
      %p151 = scmp.eq.s32.totalorder %s19, 1
      %p152 = por %p150, %p151
      %p154 = scmp.ne.s32.totalorder %s137, %s153
      %p155 = scmp.eq.s32.totalorder %s19, 0
      %p156 = por %p154, %p155
      %p157 = scmp.le.s32.totalorder 1, %s13
      %p158 = scmp.lt.s32.totalorder %s13, 3
      %p159 = pnand %p157, %p158
      %p160 = pneg %p159
      // Predicated region
      $region9: #{tpu_custom_call.1} parent=5 // pred_check
        _
      $region10: #{tpu_custom_call.1} parent=5 // pred_check_branch
        %162 = sbr.rel (%p159) target = $region12
      $region11: #{tpu_custom_call.1} parent=5 // pred_region
        %s163 = ssub.s32 %s13, 1
        // Predicated region
        $region13: #{tpu_custom_call.1} parent=11 // pred_check
          %p164 = pneg %p60
        $region14: #{tpu_custom_call.1} parent=11 // pred_check_branch
          %166 = sbr.rel (%p164) target = $region16
        $region15: #{tpu_custom_call.1} parent=11 // pred_region
          %s168 = ssub.s32 16, 16
          %169 = vsyncadd [#allocation4], %s168
          %s171 = sshll.u32 %s1, 4
          %s172 = int_to_ptr.vmem [resolvable:$true] %s171
          %174 = dma.vmem_to_smem %s172, 16, [#allocation3], [#allocation4]
        $region16: #{tpu_custom_call.1} parent=11 // pred_fallthru
          _
        // Predicated region
        $region17: #{tpu_custom_call.1} parent=11 // pred_check
          %p175 = pneg %p81
        $region18: #{tpu_custom_call.1} parent=11 // pred_check_branch
          %177 = sbr.rel (%p175) target = $region20
        $region19: #{tpu_custom_call.1} parent=11 // pred_region
          _
        $region20: #{tpu_custom_call.1} parent=11 // pred_fallthru
          _
        // Predicated region
        $region21: #{tpu_custom_call.1} parent=11 // pred_check
          %p178 = pneg %p102
        $region22: #{tpu_custom_call.1} parent=11 // pred_check_branch
          %180 = sbr.rel (%p178) target = $region24
        $region23: #{tpu_custom_call.1} parent=11 // pred_region
          _
        $region24: #{tpu_custom_call.1} parent=11 // pred_fallthru
          _
        // Predicated region
        $region25: #{tpu_custom_call.1} parent=11 // pred_check
          %p181 = pneg %p123
        $region26: #{tpu_custom_call.1} parent=11 // pred_check_branch
          %183 = sbr.rel (%p181) target = $region28
        $region27: #{tpu_custom_call.1} parent=11 // pred_region
          _
        $region28: #{tpu_custom_call.1} parent=11 // pred_fallthru
          _
      $region12: #{tpu_custom_call.1} parent=5 // pred_fallthru
        _
      %p184 = scmp.lt.s32.totalorder %s13, 2
      // Predicated region
      $region29: #{tpu_custom_call.1} parent=5 // pred_check
        %p185 = pneg %p184
      $region30: #{tpu_custom_call.1} parent=5 // pred_check_branch
        %187 = sbr.rel (%p185) target = $region32
      $region31: #{tpu_custom_call.1} parent=5 // pred_region
        // Predicated region
        $region33: #{tpu_custom_call.1} parent=31 // pred_check
          %p188 = pneg %p33
        $region34: #{tpu_custom_call.1} parent=31 // pred_check_branch
          %190 = sbr.rel (%p188) target = $region36
        $region35: #{tpu_custom_call.1} parent=31 // pred_region
          %p191 = scmp.lt.s32.totalorder %s13, 1
          %s192 = scalar_select %p191, %s13, 1
          %s193 = smul.addr %s192, 15
          %s194 = smul.addr %s193, 8
          %s195 = scalar_lea.vmem %s0, %s194
        $region36: #{tpu_custom_call.1} parent=31 // pred_fallthru
          _
      $region32: #{tpu_custom_call.1} parent=5 // pred_fallthru
        _
      %p196 = scmp.le.s32.totalorder 1, %s13
      %p197 = scmp.lt.s32.totalorder %s13, 3
      %p198 = pnand %p196, %p197
      %p199 = pneg %p198
      // Predicated region
      $region37: #{tpu_custom_call.1} parent=5 // pred_check
        _
      $region38: #{tpu_custom_call.1} parent=5 // pred_check_branch
        %201 = sbr.rel (%p198) target = $region40
      $region39: #{tpu_custom_call.1} parent=5 // pred_region
        %s202 = ssub.s32 %s13, 1
        // Predicated region
        $region41: #{tpu_custom_call.1} parent=39 // pred_check
          %p203 = pneg %p60
        $region42: #{tpu_custom_call.1} parent=39 // pred_check_branch
          %205 = sbr.rel (%p203) target = $region44
        $region43: #{tpu_custom_call.1} parent=39 // pred_region
          %206 = dma.done [#allocation4], 16
        $region44: #{tpu_custom_call.1} parent=39 // pred_fallthru
          _
        %207 = sfence
        %p208 = scmp.lt.s32.totalorder %s18, 1
        %s209 = scalar_select %p208, %s18, 1
        %s210 = smul.addr %s209, 15
        %s211 = smul.addr %s210, 8
        %s212 = scalar_lea.vmem %s0, %s211
        %p213 = pneg %p39
        %p214 = pneg %p36
        %p215 = pneg %p60
        %p216 = pneg %p57
        %p217 = pneg %p81
        %p218 = pneg %p78
        %p219 = pneg %p102
        %p220 = pneg %p99
        %p221 = pneg %p123
        %p222 = pneg %p120
        %p223 = pneg %p149
        %p224 = pneg %p146
        %p225 = scmp.lt.s32.totalorder %s18, 1
        %s226 = scalar_select %p225, %s18, 1
        %s227 = smul.addr %s226, 3
        %s228 = smul.addr %s227, 8
        %s229 = scalar_lea.vmem %s5, %s228
        %p230 = scmp.lt.s32.totalorder %s18, 1
        %s231 = scalar_select %p230, %s18, 1
        %s232 = smul.addr %s231, 15
        %s233 = smul.addr %s232, 8
        %s234 = scalar_lea.vmem %s0, %s233
        %p235 = scmp.lt.s32.totalorder %s18, 1
        %s236 = scalar_select %p235, %s18, 1
        %s237 = smul.addr %s236, 3
        %s238 = smul.addr %s237, 8
        %s239 = scalar_lea.vmem %s5, %s238
        %v240 = vld [vmem:[%s234] sm:$0xff]
        %v241 = vld [vmem:[%s234 + $0x8] sm:$0xff]
        %v242 = vld [vmem:[%s234 + $0x10] sm:$0xff]
        %v243 = vld [vmem:[%s234 + $0x18] sm:$0xff]
        %v244 = vld [vmem:[%s234 + $0x20] sm:$0x1]
        %s245 = sld [smem:[#allocation3]]
        %v246 = vstv %s245
        %v247 = vmul.f32 %v246, %v240
        %v248 = vmul.f32 %v246, %v241
        %v249 = vmul.f32 %v246, %v242
        %v250 = vmul.f32 %v246, %v243
        %v251 = vadd.f32 %v247, 0.0
        %v252 = vadd.f32 %v248, 0.0
        %v253 = vadd.f32 %v249, 0.0
        %v254 = vadd.f32 %v250, 0.0
        %s255 = sld [smem:[#allocation3 + $0x2]]
        %v256 = vstv %s255
        %v257 = vmul.f32 %v256, %v240
        %v258 = vmul.f32 %v256, %v241
        %v259 = vmul.f32 %v256, %v242
        %v260 = vmul.f32 %v256, %v243
        %v261 = vmul.f32 %v256, %v244
        %vm267 = vcmask 1046528
        %v268 = vrot.slane %v257, 1
        %v269 = vrot.slane %v258, 1
        %v270 = vsel %vm267, %v268, %v269
        %v271 = vrot.slane %v259, 1
        %v272 = vsel %vm267, %v269, %v271
        %v273 = vrot.slane %v260, 1
        %v274 = vsel %vm267, %v271, %v273
        %v275 = vrot.slane %v261, 1
        %v276 = vsel %vm267, %v273, %v275
        %v281 = vadd.f32 %v251, %v270
        %v282 = vadd.f32 %v252, %v272
        %v283 = vadd.f32 %v253, %v274
        %v284 = vadd.f32 %v254, %v276
        %s285 = sld [smem:[#allocation3 + $0x1]]
        %v286 = vstv %s285
        %v287 = vmul.f32 %v286, %v240
        %v288 = vmul.f32 %v286, %v241
        %v289 = vmul.f32 %v286, %v242
        %v290 = vmul.f32 %v286, %v243
        %v291 = vadd.f32 %v287, 0.0
        %v292 = vadd.f32 %v288, 0.0
        %v293 = vadd.f32 %v289, 0.0
        %v294 = vadd.f32 %v290, 0.0
        %s295 = sld [smem:[#allocation3 + $0x3]]
        %v296 = vstv %s295
        %v297 = vmul.f32 %v296, %v240
        %v298 = vmul.f32 %v296, %v241
        %v299 = vmul.f32 %v296, %v242
        %v300 = vmul.f32 %v296, %v243
        %v301 = vmul.f32 %v296, %v244
        %v307 = vrot.slane %v297, 1
        %v308 = vrot.slane %v298, 1
        %v309 = vsel %vm267, %v307, %v308
        %v310 = vrot.slane %v299, 1
        %v311 = vsel %vm267, %v308, %v310
        %v312 = vrot.slane %v300, 1
        %v313 = vsel %vm267, %v310, %v312
        %v314 = vrot.slane %v301, 1
        %v315 = vsel %vm267, %v312, %v314
        %v320 = vadd.f32 %v291, %v309
        %v321 = vadd.f32 %v292, %v311
        %v322 = vadd.f32 %v293, %v313
        %v323 = vadd.f32 %v294, %v315
        %s324 = scalar_lea.vmem %s234, 40
        %v325 = vld [vmem:[%s324] sm:$0xff]
        %v326 = vld [vmem:[%s324 + $0x8] sm:$0xff]
        %v327 = vld [vmem:[%s324 + $0x10] sm:$0xff]
        %v328 = vld [vmem:[%s324 + $0x18] sm:$0xff]
        %v329 = vld [vmem:[%s324 + $0x20] sm:$0x1]
        %s330 = sld [smem:[#allocation3 + $0x4]]
        %v331 = vstv %s330
        %v332 = vmul.f32 %v331, %v325
        %v333 = vmul.f32 %v331, %v326
        %v334 = vmul.f32 %v331, %v327
        %v335 = vmul.f32 %v331, %v328
        %v336 = vadd.f32 %v281, %v332
        %v337 = vadd.f32 %v282, %v333
        %v338 = vadd.f32 %v283, %v334
        %v339 = vadd.f32 %v284, %v335
        %s340 = sld [smem:[#allocation3 + $0x6]]
        %v341 = vstv %s340
        %v342 = vmul.f32 %v341, %v325
        %v343 = vmul.f32 %v341, %v326
        %v344 = vmul.f32 %v341, %v327
        %v345 = vmul.f32 %v341, %v328
        %v346 = vmul.f32 %v341, %v329
        %v352 = vrot.slane %v342, 1
        %v353 = vrot.slane %v343, 1
        %v354 = vsel %vm267, %v352, %v353
        %v355 = vrot.slane %v344, 1
        %v356 = vsel %vm267, %v353, %v355
        %v357 = vrot.slane %v345, 1
        %v358 = vsel %vm267, %v355, %v357
        %v359 = vrot.slane %v346, 1
        %v360 = vsel %vm267, %v357, %v359
        %v365 = vadd.f32 %v336, %v354
        %v366 = vadd.f32 %v337, %v356
        %v367 = vadd.f32 %v338, %v358
        %v368 = vadd.f32 %v339, %v360
        %s369 = sld [smem:[#allocation3 + $0x5]]
        %v370 = vstv %s369
        %v371 = vmul.f32 %v370, %v325
        %v372 = vmul.f32 %v370, %v326
        %v373 = vmul.f32 %v370, %v327
        %v374 = vmul.f32 %v370, %v328
        %v375 = vadd.f32 %v320, %v371
        %v376 = vadd.f32 %v321, %v372
        %v377 = vadd.f32 %v322, %v373
        %v378 = vadd.f32 %v323, %v374
        %s379 = sld [smem:[#allocation3 + $0x7]]
        %v380 = vstv %s379
        %v381 = vmul.f32 %v380, %v325
        %v382 = vmul.f32 %v380, %v326
        %v383 = vmul.f32 %v380, %v327
        %v384 = vmul.f32 %v380, %v328
        %v385 = vmul.f32 %v380, %v329
        %v391 = vrot.slane %v381, 1
        %v392 = vrot.slane %v382, 1
        %v393 = vsel %vm267, %v391, %v392
        %v394 = vrot.slane %v383, 1
        %v395 = vsel %vm267, %v392, %v394
        %v396 = vrot.slane %v384, 1
        %v397 = vsel %vm267, %v394, %v396
        %v398 = vrot.slane %v385, 1
        %v399 = vsel %vm267, %v396, %v398
        %v404 = vadd.f32 %v375, %v393
        %v405 = vadd.f32 %v376, %v395
        %v406 = vadd.f32 %v377, %v397
        %v407 = vadd.f32 %v378, %v399
        %s408 = scalar_lea.vmem %s234, 80
        %v409 = vld [vmem:[%s408] sm:$0xff]
        %v410 = vld [vmem:[%s408 + $0x8] sm:$0xff]
        %v411 = vld [vmem:[%s408 + $0x10] sm:$0xff]
        %v412 = vld [vmem:[%s408 + $0x18] sm:$0xff]
        %v413 = vld [vmem:[%s408 + $0x20] sm:$0x1]
        %s414 = sld [smem:[#allocation3 + $0x8]]
        %v415 = vstv %s414
        %v416 = vmul.f32 %v415, %v409
        %v417 = vmul.f32 %v415, %v410
        %v418 = vmul.f32 %v415, %v411
        %v419 = vmul.f32 %v415, %v412
        %v420 = vadd.f32 %v365, %v416
        %v421 = vadd.f32 %v366, %v417
        %v422 = vadd.f32 %v367, %v418
        %v423 = vadd.f32 %v368, %v419
        %s424 = sld [smem:[#allocation3 + $0xa]]
        %v425 = vstv %s424
        %v426 = vmul.f32 %v425, %v409
        %v427 = vmul.f32 %v425, %v410
        %v428 = vmul.f32 %v425, %v411
        %v429 = vmul.f32 %v425, %v412
        %v430 = vmul.f32 %v425, %v413
        %v436 = vrot.slane %v426, 1
        %v437 = vrot.slane %v427, 1
        %v438 = vsel %vm267, %v436, %v437
        %v439 = vrot.slane %v428, 1
        %v440 = vsel %vm267, %v437, %v439
        %v441 = vrot.slane %v429, 1
        %v442 = vsel %vm267, %v439, %v441
        %v443 = vrot.slane %v430, 1
        %v444 = vsel %vm267, %v441, %v443
        %v449 = vadd.f32 %v420, %v438
        %v450 = vadd.f32 %v421, %v440
        %v451 = vadd.f32 %v422, %v442
        %v452 = vadd.f32 %v423, %v444
        %s453 = sld [smem:[#allocation3 + $0x9]]
        %v454 = vstv %s453
        %v455 = vmul.f32 %v454, %v409
        %v456 = vmul.f32 %v454, %v410
        %v457 = vmul.f32 %v454, %v411
        %v458 = vmul.f32 %v454, %v412
        %v459 = vadd.f32 %v404, %v455
        %v460 = vadd.f32 %v405, %v456
        %v461 = vadd.f32 %v406, %v457
        %v462 = vadd.f32 %v407, %v458
        %s463 = sld [smem:[#allocation3 + $0xb]]
        %v464 = vstv %s463
        %v465 = vmul.f32 %v464, %v409
        %v466 = vmul.f32 %v464, %v410
        %v467 = vmul.f32 %v464, %v411
        %v468 = vmul.f32 %v464, %v412
        %v469 = vmul.f32 %v464, %v413
        %v475 = vrot.slane %v465, 1
        %v476 = vrot.slane %v466, 1
        %v477 = vsel %vm267, %v475, %v476
        %v478 = vrot.slane %v467, 1
        %v479 = vsel %vm267, %v476, %v478
        %v480 = vrot.slane %v468, 1
        %v481 = vsel %vm267, %v478, %v480
        %v482 = vrot.slane %v469, 1
        %v483 = vsel %vm267, %v480, %v482
        %v488 = vadd.f32 %v459, %v477
        %v489 = vadd.f32 %v460, %v479
        %v490 = vadd.f32 %v461, %v481
        %v491 = vadd.f32 %v462, %v483
        %s492 = sld [smem:[#allocation2]]
        %v493 = vstv %s492
        %v494 = vadd.f32 %v493, %v449
        %v495 = vadd.f32 %v493, %v450
        %v496 = vadd.f32 %v493, %v451
        %v497 = vadd.f32 %v493, %v452
        %502 = vrot.lane.b32.xlu0 %v488, 127
        %v503 = vpop.permute.xlu0 %502
        %504 = vrot.lane.b32.xlu0 %v489, 127
        %v505 = vpop.permute.xlu0 %504
        %506 = vrot.lane.b32.xlu0 %v490, 127
        %v507 = vpop.permute.xlu0 %506
        %508 = vrot.lane.b32.xlu0 %v491, 127
        %v509 = vpop.permute.xlu0 %508
        %v514 = vadd.f32 %v494, %v503
        %v515 = vadd.f32 %v495, %v505
        %v516 = vadd.f32 %v496, %v507
        %v517 = vadd.f32 %v497, %v509
        %v518 = vmul.f32 %v514, 0.5
        %v519 = vmul.f32 %v515, 0.5
        %v520 = vmul.f32 %v516, 0.5
        %v521 = vmul.f32 %v517, 0.5
        %v522 = vmul.f32 %v514, %v514
        %v523 = vmul.f32 %v515, %v515
        %v524 = vmul.f32 %v516, %v516
        %v525 = vmul.f32 %v517, %v517
        %v526 = vmul.f32 %v522, %v514
        %v527 = vmul.f32 %v523, %v515
        %v528 = vmul.f32 %v524, %v516
        %v529 = vmul.f32 %v525, %v517
        %v530 = vmul.f32 %v526, 0.044715
        %v531 = vmul.f32 %v527, 0.044715
        %v532 = vmul.f32 %v528, 0.044715
        %v533 = vmul.f32 %v529, 0.044715
        %v534 = vadd.f32 %v514, %v530
        %v535 = vadd.f32 %v515, %v531
        %v536 = vadd.f32 %v516, %v532
        %v537 = vadd.f32 %v517, %v533
        %v538 = vmul.f32 %v534, 0.7978846
        %v539 = vmul.f32 %v535, 0.7978846
        %v540 = vmul.f32 %v536, 0.7978846
        %v541 = vmul.f32 %v537, 0.7978846
        %v542 = vtanh.pop %v538
        %v543 = vtanh.pop %v539
        %v544 = vtanh.pop %v540
        %v545 = vtanh.pop %v541
        %v546 = vadd.f32 %v542, 1.0
        %v547 = vadd.f32 %v543, 1.0
        %v548 = vadd.f32 %v544, 1.0
        %v549 = vadd.f32 %v545, 1.0
        %v550 = vmul.f32 %v518, %v546
        %v551 = vmul.f32 %v519, %v547
        %v552 = vmul.f32 %v520, %v548
        %v553 = vmul.f32 %v521, %v549
        %v554 = vld [vmem:[%s3] sm:$0xff]
        %v555 = vld [vmem:[%s3 + $0x8] sm:$0xff]
        %v556 = vld [vmem:[%s3 + $0x10] sm:$0x3]
        %vm557 = vcmask 261120
        %v559 = vsel %vm557, %v554, 0
        %v562 = vsel %vm557, %v555, 0
        %v565 = vsel %vm557, %v556, 0
        %567 = vmatprep.subr.mxu0 0.0
        %v568 = vand.u32 %v550, 4294901760
        %569 = vmatpush1.msra.mxu0 %v568
        %570 = vmatprep.subr.mxu0 0.0
        %v571 = vand.u32 %v551, 4294901760
        %572 = vmatpush1.msra.mxu0 %v571
        %573 = vmatprep.subr.mxu0 0.0
        %v574 = vand.u32 %v552, 4294901760
        %575 = vmatpush1.msra.mxu0 %v574
        %576 = vmatprep.subr.mxu0 0.0
        %v577 = vand.u32 %v553, 4294901760
        %578 = vmatpush1.msra.mxu0 %v577
        %579 = vmatprep.subr.mxu0 0.0
        %580 = vmatpush1.msra.mxu0 0.0
        %581 = vmatprep.subr.mxu0 0.0
        %582 = vmatpush1.msra.mxu0 0.0
        %583 = vmatprep.subr.mxu0 0.0
        %584 = vmatpush1.msra.mxu0 0.0
        %585 = vmatprep.subr.mxu0 0.0
        %586 = vmatpush1.msra.mxu0 0.0
        %587 = vmatprep.subr.mxu0 0.0
        %588 = vmatpush1.msra.mxu0 0.0
        %589 = vmatprep.subr.mxu0 0.0
        %590 = vmatpush1.msra.mxu0 0.0
        %591 = vmatprep.subr.mxu0 0.0
        %592 = vmatpush1.msra.mxu0 0.0
        %593 = vmatprep.subr.mxu0 0.0
        %594 = vmatpush1.msra.mxu0 0.0
        %595 = vmatprep.subr.mxu0 0.0
        %596 = vmatpush1.msra.mxu0 0.0
        %597 = vmatprep.subr.mxu0 0.0
        %598 = vmatpush1.msra.mxu0 0.0
        %599 = vmatprep.subr.mxu0 0.0
        %600 = vmatpush1.msra.mxu0 0.0
        %601 = vmatprep.subr.mxu0 0.0
        %602 = vmatpush1.msra.mxu0 0.0
        %603 = vmatprep.subr.mxu0 0.0
        %604 = vmatpush1.msra.mxu0 0.0
        %605 = vmatprep.subr.mxu0 0.0
        %606 = vmatpush1.msra.mxu0 0.0
        %607 = vmatprep.subr.mxu0 0.0
        %608 = vmatpush1.msra.mxu0 0.0
        %609 = vmatprep.subr.mxu0 0.0
        %610 = vmatpush1.msra.mxu0 0.0
        %611 = vmatprep.subr.mxu0 0.0
        %612 = vmatpush1.msra.mxu0 0.0
        %613 = vmatprep.subr.mxu0 0.0
        %614 = vmatpush1.msra.mxu0 0.0
        %615 = vmatprep.subr.mxu0 0.0
        %616 = vmatpush1.msra.mxu0 0.0
        %617 = vmatprep.subr.mxu0 0.0
        %618 = vmatpush1.msra.mxu0 0.0
        %619 = vmatprep.subr.mxu0 0.0
        %620 = vmatpush1.msra.mxu0 0.0
        %621 = vmatprep.subr.mxu0 0.0
        %622 = vmatpush1.msra.mxu0 0.0
        %623 = vmatprep.subr.mxu0 0.0
        %624 = vmatpush1.msra.mxu0 0.0
        %625 = vmatprep.subr.mxu0 0.0
        %626 = vmatpush1.msra.mxu0 0.0
        %627 = vmatprep.subr.mxu0 0.0
        %628 = vmatpush1.msra.mxu0 0.0
        %629 = vmatprep.subr.mxu0 0.0
        %630 = vmatpush1.msra.mxu0 0.0
        %631 = vmatprep.subr.mxu0 0.0
        %632 = vmatpush1.msra.mxu0 0.0
        %633 = vmatprep.subr.mxu0 0.0
        %634 = vmatpush1.msra.mxu0 0.0
        %635 = vmatprep.mubr.f32.mxu0 0.0
        %v636 = vand.u32 %v559, 4294901760
        %v637 = vsub.f32 %v559, %v636
        %v638 = vand.u32 %v637, 4294901760
        %v639 = vsub.f32 %v637, %v638
        %v640 = vand.u32 %v639, 4294901760
        %641 = vmatmul.mubr.f32.gmra.mrb[0].mxu0 %v640
        %v642 = vpop.f32.mrb[0].mxu0
        %v643 = vadd.f32 0.0, %v642
        %v644 = vpop.f32.mrb[0].mxu0
        %645 = vmatprep.mubr.f32.mxu0 0.0
        %v646 = vand.u32 %v562, 4294901760
        %v647 = vsub.f32 %v562, %v646
        %v648 = vand.u32 %v647, 4294901760
        %v649 = vsub.f32 %v647, %v648
        %v650 = vand.u32 %v649, 4294901760
        %651 = vmatmul.mubr.f32.gmra.mrb[0].mxu0 %v650
        %v652 = vpop.f32.mrb[0].mxu0
        %v653 = vadd.f32 0.0, %v652
        %v654 = vpop.f32.mrb[0].mxu0
        %655 = vmatprep.mubr.f32.mxu0 0.0
        %v656 = vand.u32 %v565, 4294901760
        %v657 = vsub.f32 %v565, %v656
        %v658 = vand.u32 %v657, 4294901760
        %v659 = vsub.f32 %v657, %v658
        %v660 = vand.u32 %v659, 4294901760
        %661 = vmatmul.mubr.f32.gmra.mrb[0].mxu0 %v660
        %v662 = vpop.f32.mrb[0].mxu0
        %v663 = vadd.f32 0.0, %v662
        %v664 = vpop.f32.mrb[0].mxu0
        %665 = vdwg.mxu0
        %666 = vmatprep.subr.mxu0 0.0
        %v667 = vand.u32 %v550, 4294901760
        %v668 = vsub.f32 %v550, %v667
        %v669 = vand.u32 %v668, 4294901760
        %v670 = vsub.f32 %v668, %v669
        %v671 = vand.u32 %v670, 4294901760
        %672 = vmatpush1.msra.mxu0 %v671
        %673 = vmatprep.subr.mxu0 0.0
        %v674 = vand.u32 %v551, 4294901760
        %v675 = vsub.f32 %v551, %v674
        %v676 = vand.u32 %v675, 4294901760
        %v677 = vsub.f32 %v675, %v676
        %v678 = vand.u32 %v677, 4294901760
        %679 = vmatpush1.msra.mxu0 %v678
        %680 = vmatprep.subr.mxu0 0.0
        %v681 = vand.u32 %v552, 4294901760
        %v682 = vsub.f32 %v552, %v681
        %v683 = vand.u32 %v682, 4294901760
        %v684 = vsub.f32 %v682, %v683
        %v685 = vand.u32 %v684, 4294901760
        %686 = vmatpush1.msra.mxu0 %v685
        %687 = vmatprep.subr.mxu0 0.0
        %v688 = vand.u32 %v553, 4294901760
        %v689 = vsub.f32 %v553, %v688
        %v690 = vand.u32 %v689, 4294901760
        %v691 = vsub.f32 %v689, %v690
        %v692 = vand.u32 %v691, 4294901760
        %693 = vmatpush1.msra.mxu0 %v692
        %694 = vmatprep.subr.mxu0 0.0
        %695 = vmatpush1.msra.mxu0 0.0
        %696 = vmatprep.subr.mxu0 0.0
        %697 = vmatpush1.msra.mxu0 0.0
        %698 = vmatprep.subr.mxu0 0.0
        %699 = vmatpush1.msra.mxu0 0.0
        %700 = vmatprep.subr.mxu0 0.0
        %701 = vmatpush1.msra.mxu0 0.0
        %702 = vmatprep.subr.mxu0 0.0
        %703 = vmatpush1.msra.mxu0 0.0
        %704 = vmatprep.subr.mxu0 0.0
        %705 = vmatpush1.msra.mxu0 0.0
        %706 = vmatprep.subr.mxu0 0.0
        %707 = vmatpush1.msra.mxu0 0.0
        %708 = vmatprep.subr.mxu0 0.0
        %709 = vmatpush1.msra.mxu0 0.0
        %710 = vmatprep.subr.mxu0 0.0
        %711 = vmatpush1.msra.mxu0 0.0
        %712 = vmatprep.subr.mxu0 0.0
        %713 = vmatpush1.msra.mxu0 0.0
        %714 = vmatprep.subr.mxu0 0.0
        %715 = vmatpush1.msra.mxu0 0.0
        %716 = vmatprep.subr.mxu0 0.0
        %717 = vmatpush1.msra.mxu0 0.0
        %718 = vmatprep.subr.mxu0 0.0
        %719 = vmatpush1.msra.mxu0 0.0
        %720 = vmatprep.subr.mxu0 0.0
        %721 = vmatpush1.msra.mxu0 0.0
        %722 = vmatprep.subr.mxu0 0.0
        %723 = vmatpush1.msra.mxu0 0.0
        %724 = vmatprep.subr.mxu0 0.0
        %725 = vmatpush1.msra.mxu0 0.0
        %726 = vmatprep.subr.mxu0 0.0
        %727 = vmatpush1.msra.mxu0 0.0
        %728 = vmatprep.subr.mxu0 0.0
        %729 = vmatpush1.msra.mxu0 0.0
        %730 = vmatprep.subr.mxu0 0.0
        %731 = vmatpush1.msra.mxu0 0.0
        %732 = vmatprep.subr.mxu0 0.0
        %733 = vmatpush1.msra.mxu0 0.0
        %734 = vmatprep.subr.mxu0 0.0
        %735 = vmatpush1.msra.mxu0 0.0
        %736 = vmatprep.subr.mxu0 0.0
        %737 = vmatpush1.msra.mxu0 0.0
        %738 = vmatprep.subr.mxu0 0.0
        %739 = vmatpush1.msra.mxu0 0.0
        %740 = vmatprep.subr.mxu0 0.0
        %741 = vmatpush1.msra.mxu0 0.0
        %742 = vmatprep.subr.mxu0 0.0
        %743 = vmatpush1.msra.mxu0 0.0
        %744 = vmatprep.subr.mxu0 0.0
        %745 = vmatpush1.msra.mxu0 0.0
        %746 = vmatprep.subr.mxu0 0.0
        %747 = vmatpush1.msra.mxu0 0.0
        %748 = vmatprep.subr.mxu0 0.0
        %749 = vmatpush1.msra.mxu0 0.0
        %750 = vmatprep.mubr.f32.mxu0 0.0
        %v751 = vand.u32 %v559, 4294901760
        %752 = vmatmul.mubr.f32.gmra.mrb[0].mxu0 %v751
        %v753 = vpop.f32.mrb[0].mxu0
        %v754 = vadd.f32 %v643, %v753
        %v755 = vpop.f32.mrb[0].mxu0
        %756 = vmatprep.mubr.f32.mxu0 0.0
        %v757 = vand.u32 %v562, 4294901760
        %758 = vmatmul.mubr.f32.gmra.mrb[0].mxu0 %v757
        %v759 = vpop.f32.mrb[0].mxu0
        %v760 = vadd.f32 %v653, %v759
        %v761 = vpop.f32.mrb[0].mxu0
        %762 = vmatprep.mubr.f32.mxu0 0.0
        %v763 = vand.u32 %v565, 4294901760
        %764 = vmatmul.mubr.f32.gmra.mrb[0].mxu0 %v763
        %v765 = vpop.f32.mrb[0].mxu0
        %v766 = vadd.f32 %v663, %v765
        %v767 = vpop.f32.mrb[0].mxu0
        %768 = vdwg.mxu0
        %769 = vmatprep.subr.mxu0 0.0
        %v770 = vand.u32 %v550, 4294901760
        %v771 = vsub.f32 %v550, %v770
        %772 = vmatpush1.msra.mxu0 %v771
        %773 = vmatprep.subr.mxu0 0.0
        %v774 = vand.u32 %v551, 4294901760
        %v775 = vsub.f32 %v551, %v774
        %776 = vmatpush1.msra.mxu0 %v775
        %777 = vmatprep.subr.mxu0 0.0
        %v778 = vand.u32 %v552, 4294901760
        %v779 = vsub.f32 %v552, %v778
        %780 = vmatpush1.msra.mxu0 %v779
        %781 = vmatprep.subr.mxu0 0.0
        %v782 = vand.u32 %v553, 4294901760
        %v783 = vsub.f32 %v553, %v782
        %784 = vmatpush1.msra.mxu0 %v783
        %785 = vmatprep.subr.mxu0 0.0
        %786 = vmatpush1.msra.mxu0 0.0
        %787 = vmatprep.subr.mxu0 0.0
        %788 = vmatpush1.msra.mxu0 0.0
        %789 = vmatprep.subr.mxu0 0.0
        %790 = vmatpush1.msra.mxu0 0.0
        %791 = vmatprep.subr.mxu0 0.0
        %792 = vmatpush1.msra.mxu0 0.0
        %793 = vmatprep.subr.mxu0 0.0
        %794 = vmatpush1.msra.mxu0 0.0
        %795 = vmatprep.subr.mxu0 0.0
        %796 = vmatpush1.msra.mxu0 0.0
        %797 = vmatprep.subr.mxu0 0.0
        %798 = vmatpush1.msra.mxu0 0.0
        %799 = vmatprep.subr.mxu0 0.0
        %800 = vmatpush1.msra.mxu0 0.0
        %801 = vmatprep.subr.mxu0 0.0
        %802 = vmatpush1.msra.mxu0 0.0
        %803 = vmatprep.subr.mxu0 0.0
        %804 = vmatpush1.msra.mxu0 0.0
        %805 = vmatprep.subr.mxu0 0.0
        %806 = vmatpush1.msra.mxu0 0.0
        %807 = vmatprep.subr.mxu0 0.0
        %808 = vmatpush1.msra.mxu0 0.0
        %809 = vmatprep.subr.mxu0 0.0
        %810 = vmatpush1.msra.mxu0 0.0
        %811 = vmatprep.subr.mxu0 0.0
        %812 = vmatpush1.msra.mxu0 0.0
        %813 = vmatprep.subr.mxu0 0.0
        %814 = vmatpush1.msra.mxu0 0.0
        %815 = vmatprep.subr.mxu0 0.0
        %816 = vmatpush1.msra.mxu0 0.0
        %817 = vmatprep.subr.mxu0 0.0
        %818 = vmatpush1.msra.mxu0 0.0
        %819 = vmatprep.subr.mxu0 0.0
        %820 = vmatpush1.msra.mxu0 0.0
        %821 = vmatprep.subr.mxu0 0.0
        %822 = vmatpush1.msra.mxu0 0.0
        %823 = vmatprep.subr.mxu0 0.0
        %824 = vmatpush1.msra.mxu0 0.0
        %825 = vmatprep.subr.mxu0 0.0
        %826 = vmatpush1.msra.mxu0 0.0
        %827 = vmatprep.subr.mxu0 0.0
        %828 = vmatpush1.msra.mxu0 0.0
        %829 = vmatprep.subr.mxu0 0.0
        %830 = vmatpush1.msra.mxu0 0.0
        %831 = vmatprep.subr.mxu0 0.0
        %832 = vmatpush1.msra.mxu0 0.0
        %833 = vmatprep.subr.mxu0 0.0
        %834 = vmatpush1.msra.mxu0 0.0
        %835 = vmatprep.subr.mxu0 0.0
        %836 = vmatpush1.msra.mxu0 0.0
        %837 = vmatprep.subr.mxu0 0.0
        %838 = vmatpush1.msra.mxu0 0.0
        %839 = vmatprep.subr.mxu0 0.0
        %840 = vmatpush1.msra.mxu0 0.0
        %841 = vmatprep.mubr.f32.mxu0 0.0
        %v842 = vand.u32 %v559, 4294901760
        %v843 = vsub.f32 %v559, %v842
        %844 = vmatmul.mubr.f32.gmra.mrb[0].mxu0 %v843
        %v845 = vpop.f32.mrb[0].mxu0
        %v846 = vadd.f32 %v754, %v845
        %v847 = vpop.f32.mrb[0].mxu0
        %848 = vmatprep.mubr.f32.mxu0 0.0
        %v849 = vand.u32 %v562, 4294901760
        %v850 = vsub.f32 %v562, %v849
        %851 = vmatmul.mubr.f32.gmra.mrb[0].mxu0 %v850
        %v852 = vpop.f32.mrb[0].mxu0
        %v853 = vadd.f32 %v760, %v852
        %v854 = vpop.f32.mrb[0].mxu0
        %855 = vmatprep.mubr.f32.mxu0 0.0
        %v856 = vand.u32 %v565, 4294901760
        %v857 = vsub.f32 %v565, %v856
        %858 = vmatmul.mubr.f32.gmra.mrb[0].mxu0 %v857
        %v859 = vpop.f32.mrb[0].mxu0
        %v860 = vadd.f32 %v766, %v859
        %v861 = vpop.f32.mrb[0].mxu0
        %862 = vdwg.mxu0
        %863 = vmatprep.subr.mxu0 0.0
        %v864 = vand.u32 %v550, 4294901760
        %865 = vmatpush1.msra.mxu0 %v864
        %866 = vmatprep.subr.mxu0 0.0
        %v867 = vand.u32 %v551, 4294901760
        %868 = vmatpush1.msra.mxu0 %v867
        %869 = vmatprep.subr.mxu0 0.0
        %v870 = vand.u32 %v552, 4294901760
        %871 = vmatpush1.msra.mxu0 %v870
        %872 = vmatprep.subr.mxu0 0.0
        %v873 = vand.u32 %v553, 4294901760
        %874 = vmatpush1.msra.mxu0 %v873
        %875 = vmatprep.subr.mxu0 0.0
        %876 = vmatpush1.msra.mxu0 0.0
        %877 = vmatprep.subr.mxu0 0.0
        %878 = vmatpush1.msra.mxu0 0.0
        %879 = vmatprep.subr.mxu0 0.0
        %880 = vmatpush1.msra.mxu0 0.0
        %881 = vmatprep.subr.mxu0 0.0
        %882 = vmatpush1.msra.mxu0 0.0
        %883 = vmatprep.subr.mxu0 0.0
        %884 = vmatpush1.msra.mxu0 0.0
        %885 = vmatprep.subr.mxu0 0.0
        %886 = vmatpush1.msra.mxu0 0.0
        %887 = vmatprep.subr.mxu0 0.0
        %888 = vmatpush1.msra.mxu0 0.0
        %889 = vmatprep.subr.mxu0 0.0
        %890 = vmatpush1.msra.mxu0 0.0
        %891 = vmatprep.subr.mxu0 0.0
        %892 = vmatpush1.msra.mxu0 0.0
        %893 = vmatprep.subr.mxu0 0.0
        %894 = vmatpush1.msra.mxu0 0.0
        %895 = vmatprep.subr.mxu0 0.0
        %896 = vmatpush1.msra.mxu0 0.0
        %897 = vmatprep.subr.mxu0 0.0
        %898 = vmatpush1.msra.mxu0 0.0
        %899 = vmatprep.subr.mxu0 0.0
        %900 = vmatpush1.msra.mxu0 0.0
        %901 = vmatprep.subr.mxu0 0.0
        %902 = vmatpush1.msra.mxu0 0.0
        %903 = vmatprep.subr.mxu0 0.0
        %904 = vmatpush1.msra.mxu0 0.0
        %905 = vmatprep.subr.mxu0 0.0
        %906 = vmatpush1.msra.mxu0 0.0
        %907 = vmatprep.subr.mxu0 0.0
        %908 = vmatpush1.msra.mxu0 0.0
        %909 = vmatprep.subr.mxu0 0.0
        %910 = vmatpush1.msra.mxu0 0.0
        %911 = vmatprep.subr.mxu0 0.0
        %912 = vmatpush1.msra.mxu0 0.0
        %913 = vmatprep.subr.mxu0 0.0
        %914 = vmatpush1.msra.mxu0 0.0
        %915 = vmatprep.subr.mxu0 0.0
        %916 = vmatpush1.msra.mxu0 0.0
        %917 = vmatprep.subr.mxu0 0.0
        %918 = vmatpush1.msra.mxu0 0.0
        %919 = vmatprep.subr.mxu0 0.0
        %920 = vmatpush1.msra.mxu0 0.0
        %921 = vmatprep.subr.mxu0 0.0
        %922 = vmatpush1.msra.mxu0 0.0
        %923 = vmatprep.subr.mxu0 0.0
        %924 = vmatpush1.msra.mxu0 0.0
        %925 = vmatprep.subr.mxu0 0.0
        %926 = vmatpush1.msra.mxu0 0.0
        %927 = vmatprep.subr.mxu0 0.0
        %928 = vmatpush1.msra.mxu0 0.0
        %929 = vmatprep.subr.mxu0 0.0
        %930 = vmatpush1.msra.mxu0 0.0
        %931 = vmatprep.mubr.f32.mxu0 0.0
        %v932 = vand.u32 %v559, 4294901760
        %v933 = vsub.f32 %v559, %v932
        %v934 = vand.u32 %v933, 4294901760
        %935 = vmatmul.mubr.f32.gmra.mrb[0].mxu0 %v934
        %v936 = vpop.f32.mrb[0].mxu0
        %v937 = vadd.f32 %v846, %v936
        %v938 = vpop.f32.mrb[0].mxu0
        %939 = vmatprep.mubr.f32.mxu0 0.0
        %v940 = vand.u32 %v562, 4294901760
        %v941 = vsub.f32 %v562, %v940
        %v942 = vand.u32 %v941, 4294901760
        %943 = vmatmul.mubr.f32.gmra.mrb[0].mxu0 %v942
        %v944 = vpop.f32.mrb[0].mxu0
        %v945 = vadd.f32 %v853, %v944
        %v946 = vpop.f32.mrb[0].mxu0
        %947 = vmatprep.mubr.f32.mxu0 0.0
        %v948 = vand.u32 %v565, 4294901760
        %v949 = vsub.f32 %v565, %v948
        %v950 = vand.u32 %v949, 4294901760
        %951 = vmatmul.mubr.f32.gmra.mrb[0].mxu0 %v950
        %v952 = vpop.f32.mrb[0].mxu0
        %v953 = vadd.f32 %v860, %v952
        %v954 = vpop.f32.mrb[0].mxu0
        %955 = vdwg.mxu0
        %956 = vmatprep.subr.mxu0 0.0
        %v957 = vand.u32 %v550, 4294901760
        %v958 = vsub.f32 %v550, %v957
        %v959 = vand.u32 %v958, 4294901760
        %960 = vmatpush1.msra.mxu0 %v959
        %961 = vmatprep.subr.mxu0 0.0
        %v962 = vand.u32 %v551, 4294901760
        %v963 = vsub.f32 %v551, %v962
        %v964 = vand.u32 %v963, 4294901760
        %965 = vmatpush1.msra.mxu0 %v964
        %966 = vmatprep.subr.mxu0 0.0
        %v967 = vand.u32 %v552, 4294901760
        %v968 = vsub.f32 %v552, %v967
        %v969 = vand.u32 %v968, 4294901760
        %970 = vmatpush1.msra.mxu0 %v969
        %971 = vmatprep.subr.mxu0 0.0
        %v972 = vand.u32 %v553, 4294901760
        %v973 = vsub.f32 %v553, %v972
        %v974 = vand.u32 %v973, 4294901760
        %975 = vmatpush1.msra.mxu0 %v974
        %976 = vmatprep.subr.mxu0 0.0
        %977 = vmatpush1.msra.mxu0 0.0
        %978 = vmatprep.subr.mxu0 0.0
        %979 = vmatpush1.msra.mxu0 0.0
        %980 = vmatprep.subr.mxu0 0.0
        %981 = vmatpush1.msra.mxu0 0.0
        %982 = vmatprep.subr.mxu0 0.0
        %983 = vmatpush1.msra.mxu0 0.0
        %984 = vmatprep.subr.mxu0 0.0
        %985 = vmatpush1.msra.mxu0 0.0
        %986 = vmatprep.subr.mxu0 0.0
        %987 = vmatpush1.msra.mxu0 0.0
        %988 = vmatprep.subr.mxu0 0.0
        %989 = vmatpush1.msra.mxu0 0.0
        %990 = vmatprep.subr.mxu0 0.0
        %991 = vmatpush1.msra.mxu0 0.0
        %992 = vmatprep.subr.mxu0 0.0
        %993 = vmatpush1.msra.mxu0 0.0
        %994 = vmatprep.subr.mxu0 0.0
        %995 = vmatpush1.msra.mxu0 0.0
        %996 = vmatprep.subr.mxu0 0.0
        %997 = vmatpush1.msra.mxu0 0.0
        %998 = vmatprep.subr.mxu0 0.0
        %999 = vmatpush1.msra.mxu0 0.0
        %1000 = vmatprep.subr.mxu0 0.0
        %1001 = vmatpush1.msra.mxu0 0.0
        %1002 = vmatprep.subr.mxu0 0.0
        %1003 = vmatpush1.msra.mxu0 0.0
        %1004 = vmatprep.subr.mxu0 0.0
        %1005 = vmatpush1.msra.mxu0 0.0
        %1006 = vmatprep.subr.mxu0 0.0
        %1007 = vmatpush1.msra.mxu0 0.0
        %1008 = vmatprep.subr.mxu0 0.0
        %1009 = vmatpush1.msra.mxu0 0.0
        %1010 = vmatprep.subr.mxu0 0.0
        %1011 = vmatpush1.msra.mxu0 0.0
        %1012 = vmatprep.subr.mxu0 0.0
        %1013 = vmatpush1.msra.mxu0 0.0
        %1014 = vmatprep.subr.mxu0 0.0
        %1015 = vmatpush1.msra.mxu0 0.0
        %1016 = vmatprep.subr.mxu0 0.0
        %1017 = vmatpush1.msra.mxu0 0.0
        %1018 = vmatprep.subr.mxu0 0.0
        %1019 = vmatpush1.msra.mxu0 0.0
        %1020 = vmatprep.subr.mxu0 0.0
        %1021 = vmatpush1.msra.mxu0 0.0
        %1022 = vmatprep.subr.mxu0 0.0
        %1023 = vmatpush1.msra.mxu0 0.0
        %1024 = vmatprep.subr.mxu0 0.0
        %1025 = vmatpush1.msra.mxu0 0.0
        %1026 = vmatprep.subr.mxu0 0.0
        %1027 = vmatpush1.msra.mxu0 0.0
        %1028 = vmatprep.subr.mxu0 0.0
        %1029 = vmatpush1.msra.mxu0 0.0
        %1030 = vmatprep.subr.mxu0 0.0
        %1031 = vmatpush1.msra.mxu0 0.0
        %1032 = vmatprep.mubr.f32.mxu0 0.0
        %v1033 = vand.u32 %v559, 4294901760
        %1034 = vmatmul.mubr.f32.gmra.mrb[0].mxu0 %v1033
        %v1035 = vpop.f32.mrb[0].mxu0
        %v1036 = vadd.f32 %v937, %v1035
        %v1037 = vpop.f32.mrb[0].mxu0
        %1038 = vmatprep.mubr.f32.mxu0 0.0
        %v1039 = vand.u32 %v562, 4294901760
        %1040 = vmatmul.mubr.f32.gmra.mrb[0].mxu0 %v1039
        %v1041 = vpop.f32.mrb[0].mxu0
        %v1042 = vadd.f32 %v945, %v1041
        %v1043 = vpop.f32.mrb[0].mxu0
        %1044 = vmatprep.mubr.f32.mxu0 0.0
        %v1045 = vand.u32 %v565, 4294901760
        %1046 = vmatmul.mubr.f32.gmra.mrb[0].mxu0 %v1045
        %v1047 = vpop.f32.mrb[0].mxu0
        %v1048 = vadd.f32 %v953, %v1047
        %v1049 = vpop.f32.mrb[0].mxu0
        %1050 = vdwg.mxu0
        %1051 = vmatprep.subr.mxu0 0.0
        %v1052 = vand.u32 %v550, 4294901760
        %1053 = vmatpush1.msra.mxu0 %v1052
        %1054 = vmatprep.subr.mxu0 0.0
        %v1055 = vand.u32 %v551, 4294901760
        %1056 = vmatpush1.msra.mxu0 %v1055
        %1057 = vmatprep.subr.mxu0 0.0
        %v1058 = vand.u32 %v552, 4294901760
        %1059 = vmatpush1.msra.mxu0 %v1058
        %1060 = vmatprep.subr.mxu0 0.0
        %v1061 = vand.u32 %v553, 4294901760
        %1062 = vmatpush1.msra.mxu0 %v1061
        %1063 = vmatprep.subr.mxu0 0.0
        %1064 = vmatpush1.msra.mxu0 0.0
        %1065 = vmatprep.subr.mxu0 0.0
        %1066 = vmatpush1.msra.mxu0 0.0
        %1067 = vmatprep.subr.mxu0 0.0
        %1068 = vmatpush1.msra.mxu0 0.0
        %1069 = vmatprep.subr.mxu0 0.0
        %1070 = vmatpush1.msra.mxu0 0.0
        %1071 = vmatprep.subr.mxu0 0.0
        %1072 = vmatpush1.msra.mxu0 0.0
        %1073 = vmatprep.subr.mxu0 0.0
        %1074 = vmatpush1.msra.mxu0 0.0
        %1075 = vmatprep.subr.mxu0 0.0
        %1076 = vmatpush1.msra.mxu0 0.0
        %1077 = vmatprep.subr.mxu0 0.0
        %1078 = vmatpush1.msra.mxu0 0.0
        %1079 = vmatprep.subr.mxu0 0.0
        %1080 = vmatpush1.msra.mxu0 0.0
        %1081 = vmatprep.subr.mxu0 0.0
        %1082 = vmatpush1.msra.mxu0 0.0
        %1083 = vmatprep.subr.mxu0 0.0
        %1084 = vmatpush1.msra.mxu0 0.0
        %1085 = vmatprep.subr.mxu0 0.0
        %1086 = vmatpush1.msra.mxu0 0.0
        %1087 = vmatprep.subr.mxu0 0.0
        %1088 = vmatpush1.msra.mxu0 0.0
        %1089 = vmatprep.subr.mxu0 0.0
        %1090 = vmatpush1.msra.mxu0 0.0
        %1091 = vmatprep.subr.mxu0 0.0
        %1092 = vmatpush1.msra.mxu0 0.0
        %1093 = vmatprep.subr.mxu0 0.0
        %1094 = vmatpush1.msra.mxu0 0.0
        %1095 = vmatprep.subr.mxu0 0.0
        %1096 = vmatpush1.msra.mxu0 0.0
        %1097 = vmatprep.subr.mxu0 0.0
        %1098 = vmatpush1.msra.mxu0 0.0
        %1099 = vmatprep.subr.mxu0 0.0
        %1100 = vmatpush1.msra.mxu0 0.0
        %1101 = vmatprep.subr.mxu0 0.0
        %1102 = vmatpush1.msra.mxu0 0.0
        %1103 = vmatprep.subr.mxu0 0.0
        %1104 = vmatpush1.msra.mxu0 0.0
        %1105 = vmatprep.subr.mxu0 0.0
        %1106 = vmatpush1.msra.mxu0 0.0
        %1107 = vmatprep.subr.mxu0 0.0
        %1108 = vmatpush1.msra.mxu0 0.0
        %1109 = vmatprep.subr.mxu0 0.0
        %1110 = vmatpush1.msra.mxu0 0.0
        %1111 = vmatprep.subr.mxu0 0.0
        %1112 = vmatpush1.msra.mxu0 0.0
        %1113 = vmatprep.subr.mxu0 0.0
        %1114 = vmatpush1.msra.mxu0 0.0
        %1115 = vmatprep.subr.mxu0 0.0
        %1116 = vmatpush1.msra.mxu0 0.0
        %1117 = vmatprep.subr.mxu0 0.0
        %1118 = vmatpush1.msra.mxu0 0.0
        %1119 = vmatprep.mubr.f32.mxu0 0.0
        %v1120 = vand.u32 %v559, 4294901760
        %1121 = vmatmul.mubr.f32.gmra.mrb[0].mxu0 %v1120
        %v1122 = vpop.f32.mrb[0].mxu0
        %v1123 = vadd.f32 %v1036, %v1122
        %v1124 = vpop.f32.mrb[0].mxu0
        %1125 = vmatprep.mubr.f32.mxu0 0.0
        %v1126 = vand.u32 %v562, 4294901760
        %1127 = vmatmul.mubr.f32.gmra.mrb[0].mxu0 %v1126
        %v1128 = vpop.f32.mrb[0].mxu0
        %v1129 = vadd.f32 %v1042, %v1128
        %v1130 = vpop.f32.mrb[0].mxu0
        %1131 = vmatprep.mubr.f32.mxu0 0.0
        %v1132 = vand.u32 %v565, 4294901760
        %1133 = vmatmul.mubr.f32.gmra.mrb[0].mxu0 %v1132
        %v1134 = vpop.f32.mrb[0].mxu0
        %v1135 = vadd.f32 %v1048, %v1134
        %v1136 = vpop.f32.mrb[0].mxu0
        %1137 = vdwg.mxu0
        %v1138 = vld [vmem:[%s4] sm:$0xff]
        %v1139 = vld [vmem:[%s4 + $0x8] sm:$0xff]
        %v1140 = vld [vmem:[%s4 + $0x10] sm:$0xff]
        %v1141 = vld [vmem:[%s4 + $0x18] sm:$0xff]
        %v1142 = vld [vmem:[%s4 + $0x20] sm:$0xff]
        %v1143 = vld [vmem:[%s4 + $0x28] sm:$0xff]
        %v1144 = vld [vmem:[%s4 + $0x30] sm:$0xff]
        %v1145 = vld [vmem:[%s4 + $0x38] sm:$0xff]
        %v1146 = vld [vmem:[%s4 + $0x40] sm:$0xff]
        %v1147 = vld [vmem:[%s4 + $0x48] sm:$0xff]
        %v1148 = vld [vmem:[%s4 + $0x50] sm:$0xff]
        %v1149 = vld [vmem:[%s4 + $0x58] sm:$0xff]
        %v1150 = vld [vmem:[%s4 + $0x60] sm:$0xff]
        %v1151 = vld [vmem:[%s4 + $0x68] sm:$0xff]
        %v1152 = vld [vmem:[%s4 + $0x70] sm:$0xff]
        %v1153 = vld [vmem:[%s4 + $0x78] sm:$0x7f]
        %vm1154 = vcmask 1039360
        %v1156 = vsel %vm1154, %v1123, 0
        %v1159 = vsel %vm1154, %v1129, 0
        %v1162 = vsel %vm1154, %v1135, 0
        %v1165 = vsel %vm267, %v1153, 0
        %1167 = vmatprep.subr.mxu0 0.0
        %v1168 = vand.u32 %v1138, 4294901760
        %1169 = vmatpush1.msra.mxu0 %v1168
        %1170 = vmatprep.subr.mxu0 0.0
        %v1171 = vand.u32 %v1139, 4294901760
        %1172 = vmatpush1.msra.mxu0 %v1171
        %1173 = vmatprep.subr.mxu0 0.0
        %v1174 = vand.u32 %v1140, 4294901760
        %1175 = vmatpush1.msra.mxu0 %v1174
        %1176 = vmatprep.subr.mxu0 0.0
        %v1177 = vand.u32 %v1141, 4294901760
        %1178 = vmatpush1.msra.mxu0 %v1177
        %1179 = vmatprep.subr.mxu0 0.0
        %v1180 = vand.u32 %v1142, 4294901760
        %1181 = vmatpush1.msra.mxu0 %v1180
        %1182 = vmatprep.subr.mxu0 0.0
        %v1183 = vand.u32 %v1143, 4294901760
        %1184 = vmatpush1.msra.mxu0 %v1183
        %1185 = vmatprep.subr.mxu0 0.0
        %v1186 = vand.u32 %v1144, 4294901760
        %1187 = vmatpush1.msra.mxu0 %v1186
        %1188 = vmatprep.subr.mxu0 0.0
        %v1189 = vand.u32 %v1145, 4294901760
        %1190 = vmatpush1.msra.mxu0 %v1189
        %1191 = vmatprep.subr.mxu0 0.0
        %v1192 = vand.u32 %v1146, 4294901760
        %1193 = vmatpush1.msra.mxu0 %v1192
        %1194 = vmatprep.subr.mxu0 0.0
        %v1195 = vand.u32 %v1147, 4294901760
        %1196 = vmatpush1.msra.mxu0 %v1195
        %1197 = vmatprep.subr.mxu0 0.0
        %v1198 = vand.u32 %v1148, 4294901760
        %1199 = vmatpush1.msra.mxu0 %v1198
        %1200 = vmatprep.subr.mxu0 0.0
        %v1201 = vand.u32 %v1149, 4294901760
        %1202 = vmatpush1.msra.mxu0 %v1201
        %1203 = vmatprep.subr.mxu0 0.0
        %v1204 = vand.u32 %v1150, 4294901760
        %1205 = vmatpush1.msra.mxu0 %v1204
        %1206 = vmatprep.subr.mxu0 0.0
        %v1207 = vand.u32 %v1151, 4294901760
        %1208 = vmatpush1.msra.mxu0 %v1207
        %1209 = vmatprep.subr.mxu0 0.0
        %v1210 = vand.u32 %v1152, 4294901760
        %1211 = vmatpush1.msra.mxu0 %v1210
        %1212 = vmatprep.subr.mxu0 0.0
        %v1213 = vand.u32 %v1165, 4294901760
        %1214 = vmatpush1.msra.mxu0 %v1213
        %1215 = vmatprep.subr.mxu0 0.0
        %1216 = vmatpush1.msra.mxu0 0.0
        %1217 = vmatprep.subr.mxu0 0.0
        %1218 = vmatpush1.msra.mxu0 0.0
        %1219 = vmatprep.subr.mxu0 0.0
        %1220 = vmatpush1.msra.mxu0 0.0
        %1221 = vmatprep.subr.mxu0 0.0
        %1222 = vmatpush1.msra.mxu0 0.0
        %1223 = vmatprep.subr.mxu0 0.0
        %1224 = vmatpush1.msra.mxu0 0.0
        %1225 = vmatprep.subr.mxu0 0.0
        %1226 = vmatpush1.msra.mxu0 0.0
        %1227 = vmatprep.subr.mxu0 0.0
        %1228 = vmatpush1.msra.mxu0 0.0
        %1229 = vmatprep.subr.mxu0 0.0
        %1230 = vmatpush1.msra.mxu0 0.0
        %1231 = vmatprep.subr.mxu0 0.0
        %1232 = vmatpush1.msra.mxu0 0.0
        %1233 = vmatprep.subr.mxu0 0.0
        %1234 = vmatpush1.msra.mxu0 0.0
        %1235 = vmatprep.subr.mxu0 0.0
        %1236 = vmatpush1.msra.mxu0 0.0
        %1237 = vmatprep.subr.mxu0 0.0
        %1238 = vmatpush1.msra.mxu0 0.0
        %1239 = vmatprep.subr.mxu0 0.0
        %1240 = vmatpush1.msra.mxu0 0.0
        %1241 = vmatprep.subr.mxu0 0.0
        %1242 = vmatpush1.msra.mxu0 0.0
        %1243 = vmatprep.subr.mxu0 0.0
        %1244 = vmatpush1.msra.mxu0 0.0
        %1245 = vmatprep.subr.mxu0 0.0
        %1246 = vmatpush1.msra.mxu0 0.0
        %1247 = vmatprep.mubr.f32.mxu0 0.0
        %v1248 = vand.u32 %v1156, 4294901760
        %v1249 = vsub.f32 %v1156, %v1248
        %v1250 = vand.u32 %v1249, 4294901760
        %v1251 = vsub.f32 %v1249, %v1250
        %v1252 = vand.u32 %v1251, 4294901760
        %1253 = vmatmul.mubr.f32.gmra.mrb[0].mxu0 %v1252
        %v1254 = vpop.f32.mrb[0].mxu0
        %v1255 = vadd.f32 0.0, %v1254
        %v1256 = vpop.f32.mrb[0].mxu0
        %1257 = vmatprep.mubr.f32.mxu0 0.0
        %v1258 = vand.u32 %v1159, 4294901760
        %v1259 = vsub.f32 %v1159, %v1258
        %v1260 = vand.u32 %v1259, 4294901760
        %v1261 = vsub.f32 %v1259, %v1260
        %v1262 = vand.u32 %v1261, 4294901760
        %1263 = vmatmul.mubr.f32.gmra.mrb[0].mxu0 %v1262
        %v1264 = vpop.f32.mrb[0].mxu0
        %v1265 = vadd.f32 0.0, %v1264
        %v1266 = vpop.f32.mrb[0].mxu0
        %1267 = vmatprep.mubr.f32.mxu0 0.0
        %v1268 = vand.u32 %v1162, 4294901760
        %v1269 = vsub.f32 %v1162, %v1268
        %v1270 = vand.u32 %v1269, 4294901760
        %v1271 = vsub.f32 %v1269, %v1270
        %v1272 = vand.u32 %v1271, 4294901760
        %1273 = vmatmul.mubr.f32.gmra.mrb[0].mxu0 %v1272
        %v1274 = vpop.f32.mrb[0].mxu0
        %v1275 = vadd.f32 0.0, %v1274
        %v1276 = vpop.f32.mrb[0].mxu0
        %1277 = vdwg.mxu0
        %1278 = vmatprep.subr.mxu0 0.0
        %v1279 = vand.u32 %v1138, 4294901760
        %v1280 = vsub.f32 %v1138, %v1279
        %v1281 = vand.u32 %v1280, 4294901760
        %v1282 = vsub.f32 %v1280, %v1281
        %v1283 = vand.u32 %v1282, 4294901760
        %1284 = vmatpush1.msra.mxu0 %v1283
        %1285 = vmatprep.subr.mxu0 0.0
        %v1286 = vand.u32 %v1139, 4294901760
        %v1287 = vsub.f32 %v1139, %v1286
        %v1288 = vand.u32 %v1287, 4294901760
        %v1289 = vsub.f32 %v1287, %v1288
        %v1290 = vand.u32 %v1289, 4294901760
        %1291 = vmatpush1.msra.mxu0 %v1290
        %1292 = vmatprep.subr.mxu0 0.0
        %v1293 = vand.u32 %v1140, 4294901760
        %v1294 = vsub.f32 %v1140, %v1293
        %v1295 = vand.u32 %v1294, 4294901760
        %v1296 = vsub.f32 %v1294, %v1295
        %v1297 = vand.u32 %v1296, 4294901760
        %1298 = vmatpush1.msra.mxu0 %v1297
        %1299 = vmatprep.subr.mxu0 0.0
        %v1300 = vand.u32 %v1141, 4294901760
        %v1301 = vsub.f32 %v1141, %v1300
        %v1302 = vand.u32 %v1301, 4294901760
        %v1303 = vsub.f32 %v1301, %v1302
        %v1304 = vand.u32 %v1303, 4294901760
        %1305 = vmatpush1.msra.mxu0 %v1304
        %1306 = vmatprep.subr.mxu0 0.0
        %v1307 = vand.u32 %v1142, 4294901760
        %v1308 = vsub.f32 %v1142, %v1307
        %v1309 = vand.u32 %v1308, 4294901760
        %v1310 = vsub.f32 %v1308, %v1309
        %v1311 = vand.u32 %v1310, 4294901760
        %1312 = vmatpush1.msra.mxu0 %v1311
        %1313 = vmatprep.subr.mxu0 0.0
        %v1314 = vand.u32 %v1143, 4294901760
        %v1315 = vsub.f32 %v1143, %v1314
        %v1316 = vand.u32 %v1315, 4294901760
        %v1317 = vsub.f32 %v1315, %v1316
        %v1318 = vand.u32 %v1317, 4294901760
        %1319 = vmatpush1.msra.mxu0 %v1318
        %1320 = vmatprep.subr.mxu0 0.0
        %v1321 = vand.u32 %v1144, 4294901760
        %v1322 = vsub.f32 %v1144, %v1321
        %v1323 = vand.u32 %v1322, 4294901760
        %v1324 = vsub.f32 %v1322, %v1323
        %v1325 = vand.u32 %v1324, 4294901760
        %1326 = vmatpush1.msra.mxu0 %v1325
        %1327 = vmatprep.subr.mxu0 0.0
        %v1328 = vand.u32 %v1145, 4294901760
        %v1329 = vsub.f32 %v1145, %v1328
        %v1330 = vand.u32 %v1329, 4294901760
        %v1331 = vsub.f32 %v1329, %v1330
        %v1332 = vand.u32 %v1331, 4294901760
        %1333 = vmatpush1.msra.mxu0 %v1332
        %1334 = vmatprep.subr.mxu0 0.0
        %v1335 = vand.u32 %v1146, 4294901760
        %v1336 = vsub.f32 %v1146, %v1335
        %v1337 = vand.u32 %v1336, 4294901760
        %v1338 = vsub.f32 %v1336, %v1337
        %v1339 = vand.u32 %v1338, 4294901760
        %1340 = vmatpush1.msra.mxu0 %v1339
        %1341 = vmatprep.subr.mxu0 0.0
        %v1342 = vand.u32 %v1147, 4294901760
        %v1343 = vsub.f32 %v1147, %v1342
        %v1344 = vand.u32 %v1343, 4294901760
        %v1345 = vsub.f32 %v1343, %v1344
        %v1346 = vand.u32 %v1345, 4294901760
        %1347 = vmatpush1.msra.mxu0 %v1346
        %1348 = vmatprep.subr.mxu0 0.0
        %v1349 = vand.u32 %v1148, 4294901760
        %v1350 = vsub.f32 %v1148, %v1349
        %v1351 = vand.u32 %v1350, 4294901760
        %v1352 = vsub.f32 %v1350, %v1351
        %v1353 = vand.u32 %v1352, 4294901760
        %1354 = vmatpush1.msra.mxu0 %v1353
        %1355 = vmatprep.subr.mxu0 0.0
        %v1356 = vand.u32 %v1149, 4294901760
        %v1357 = vsub.f32 %v1149, %v1356
        %v1358 = vand.u32 %v1357, 4294901760
        %v1359 = vsub.f32 %v1357, %v1358
        %v1360 = vand.u32 %v1359, 4294901760
        %1361 = vmatpush1.msra.mxu0 %v1360
        %1362 = vmatprep.subr.mxu0 0.0
        %v1363 = vand.u32 %v1150, 4294901760
        %v1364 = vsub.f32 %v1150, %v1363
        %v1365 = vand.u32 %v1364, 4294901760
        %v1366 = vsub.f32 %v1364, %v1365
        %v1367 = vand.u32 %v1366, 4294901760
        %1368 = vmatpush1.msra.mxu0 %v1367
        %1369 = vmatprep.subr.mxu0 0.0
        %v1370 = vand.u32 %v1151, 4294901760
        %v1371 = vsub.f32 %v1151, %v1370
        %v1372 = vand.u32 %v1371, 4294901760
        %v1373 = vsub.f32 %v1371, %v1372
        %v1374 = vand.u32 %v1373, 4294901760
        %1375 = vmatpush1.msra.mxu0 %v1374
        %1376 = vmatprep.subr.mxu0 0.0
        %v1377 = vand.u32 %v1152, 4294901760
        %v1378 = vsub.f32 %v1152, %v1377
        %v1379 = vand.u32 %v1378, 4294901760
        %v1380 = vsub.f32 %v1378, %v1379
        %v1381 = vand.u32 %v1380, 4294901760
        %1382 = vmatpush1.msra.mxu0 %v1381
        %1383 = vmatprep.subr.mxu0 0.0
        %v1384 = vand.u32 %v1165, 4294901760
        %v1385 = vsub.f32 %v1165, %v1384
        %v1386 = vand.u32 %v1385, 4294901760
        %v1387 = vsub.f32 %v1385, %v1386
        %v1388 = vand.u32 %v1387, 4294901760
        %1389 = vmatpush1.msra.mxu0 %v1388
        %1390 = vmatprep.subr.mxu0 0.0
        %1391 = vmatpush1.msra.mxu0 0.0
        %1392 = vmatprep.subr.mxu0 0.0
        %1393 = vmatpush1.msra.mxu0 0.0
        %1394 = vmatprep.subr.mxu0 0.0
        %1395 = vmatpush1.msra.mxu0 0.0
        %1396 = vmatprep.subr.mxu0 0.0
        %1397 = vmatpush1.msra.mxu0 0.0
        %1398 = vmatprep.subr.mxu0 0.0
        %1399 = vmatpush1.msra.mxu0 0.0
        %1400 = vmatprep.subr.mxu0 0.0
        %1401 = vmatpush1.msra.mxu0 0.0
        %1402 = vmatprep.subr.mxu0 0.0
        %1403 = vmatpush1.msra.mxu0 0.0
        %1404 = vmatprep.subr.mxu0 0.0
        %1405 = vmatpush1.msra.mxu0 0.0
        %1406 = vmatprep.subr.mxu0 0.0
        %1407 = vmatpush1.msra.mxu0 0.0
        %1408 = vmatprep.subr.mxu0 0.0
        %1409 = vmatpush1.msra.mxu0 0.0
        %1410 = vmatprep.subr.mxu0 0.0
        %1411 = vmatpush1.msra.mxu0 0.0
        %1412 = vmatprep.subr.mxu0 0.0
        %1413 = vmatpush1.msra.mxu0 0.0
        %1414 = vmatprep.subr.mxu0 0.0
        %1415 = vmatpush1.msra.mxu0 0.0
        %1416 = vmatprep.subr.mxu0 0.0
        %1417 = vmatpush1.msra.mxu0 0.0
        %1418 = vmatprep.subr.mxu0 0.0
        %1419 = vmatpush1.msra.mxu0 0.0
        %1420 = vmatprep.subr.mxu0 0.0
        %1421 = vmatpush1.msra.mxu0 0.0
        %1422 = vmatprep.mubr.f32.mxu0 0.0
        %v1423 = vand.u32 %v1156, 4294901760
        %1424 = vmatmul.mubr.f32.gmra.mrb[0].mxu0 %v1423
        %v1425 = vpop.f32.mrb[0].mxu0
        %v1426 = vadd.f32 %v1255, %v1425
        %v1427 = vpop.f32.mrb[0].mxu0
        %1428 = vmatprep.mubr.f32.mxu0 0.0
        %v1429 = vand.u32 %v1159, 4294901760
        %1430 = vmatmul.mubr.f32.gmra.mrb[0].mxu0 %v1429
        %v1431 = vpop.f32.mrb[0].mxu0
        %v1432 = vadd.f32 %v1265, %v1431
        %v1433 = vpop.f32.mrb[0].mxu0
        %1434 = vmatprep.mubr.f32.mxu0 0.0
        %v1435 = vand.u32 %v1162, 4294901760
        %1436 = vmatmul.mubr.f32.gmra.mrb[0].mxu0 %v1435
        %v1437 = vpop.f32.mrb[0].mxu0
        %v1438 = vadd.f32 %v1275, %v1437
        %v1439 = vpop.f32.mrb[0].mxu0
        %1440 = vdwg.mxu0
        %1441 = vmatprep.subr.mxu0 0.0
        %v1442 = vand.u32 %v1138, 4294901760
        %v1443 = vsub.f32 %v1138, %v1442
        %1444 = vmatpush1.msra.mxu0 %v1443
        %1445 = vmatprep.subr.mxu0 0.0
        %v1446 = vand.u32 %v1139, 4294901760
        %v1447 = vsub.f32 %v1139, %v1446
        %1448 = vmatpush1.msra.mxu0 %v1447
        %1449 = vmatprep.subr.mxu0 0.0
        %v1450 = vand.u32 %v1140, 4294901760
        %v1451 = vsub.f32 %v1140, %v1450
        %1452 = vmatpush1.msra.mxu0 %v1451
        %1453 = vmatprep.subr.mxu0 0.0
        %v1454 = vand.u32 %v1141, 4294901760
        %v1455 = vsub.f32 %v1141, %v1454
        %1456 = vmatpush1.msra.mxu0 %v1455
        %1457 = vmatprep.subr.mxu0 0.0
        %v1458 = vand.u32 %v1142, 4294901760
        %v1459 = vsub.f32 %v1142, %v1458
        %1460 = vmatpush1.msra.mxu0 %v1459
        %1461 = vmatprep.subr.mxu0 0.0
        %v1462 = vand.u32 %v1143, 4294901760
        %v1463 = vsub.f32 %v1143, %v1462
        %1464 = vmatpush1.msra.mxu0 %v1463
        %1465 = vmatprep.subr.mxu0 0.0
        %v1466 = vand.u32 %v1144, 4294901760
        %v1467 = vsub.f32 %v1144, %v1466
        %1468 = vmatpush1.msra.mxu0 %v1467
        %1469 = vmatprep.subr.mxu0 0.0
        %v1470 = vand.u32 %v1145, 4294901760
        %v1471 = vsub.f32 %v1145, %v1470
        %1472 = vmatpush1.msra.mxu0 %v1471
        %1473 = vmatprep.subr.mxu0 0.0
        %v1474 = vand.u32 %v1146, 4294901760
        %v1475 = vsub.f32 %v1146, %v1474
        %1476 = vmatpush1.msra.mxu0 %v1475
        %1477 = vmatprep.subr.mxu0 0.0
        %v1478 = vand.u32 %v1147, 4294901760
        %v1479 = vsub.f32 %v1147, %v1478
        %1480 = vmatpush1.msra.mxu0 %v1479
        %1481 = vmatprep.subr.mxu0 0.0
        %v1482 = vand.u32 %v1148, 4294901760
        %v1483 = vsub.f32 %v1148, %v1482
        %1484 = vmatpush1.msra.mxu0 %v1483
        %1485 = vmatprep.subr.mxu0 0.0
        %v1486 = vand.u32 %v1149, 4294901760
        %v1487 = vsub.f32 %v1149, %v1486
        %1488 = vmatpush1.msra.mxu0 %v1487
        %1489 = vmatprep.subr.mxu0 0.0
        %v1490 = vand.u32 %v1150, 4294901760
        %v1491 = vsub.f32 %v1150, %v1490
        %1492 = vmatpush1.msra.mxu0 %v1491
        %1493 = vmatprep.subr.mxu0 0.0
        %v1494 = vand.u32 %v1151, 4294901760
        %v1495 = vsub.f32 %v1151, %v1494
        %1496 = vmatpush1.msra.mxu0 %v1495
        %1497 = vmatprep.subr.mxu0 0.0
        %v1498 = vand.u32 %v1152, 4294901760
        %v1499 = vsub.f32 %v1152, %v1498
        %1500 = vmatpush1.msra.mxu0 %v1499
        %1501 = vmatprep.subr.mxu0 0.0
        %v1502 = vand.u32 %v1165, 4294901760
        %v1503 = vsub.f32 %v1165, %v1502
        %1504 = vmatpush1.msra.mxu0 %v1503
        %1505 = vmatprep.subr.mxu0 0.0
        %1506 = vmatpush1.msra.mxu0 0.0
        %1507 = vmatprep.subr.mxu0 0.0
        %1508 = vmatpush1.msra.mxu0 0.0
        %1509 = vmatprep.subr.mxu0 0.0
        %1510 = vmatpush1.msra.mxu0 0.0
        %1511 = vmatprep.subr.mxu0 0.0
        %1512 = vmatpush1.msra.mxu0 0.0
        %1513 = vmatprep.subr.mxu0 0.0
        %1514 = vmatpush1.msra.mxu0 0.0
        %1515 = vmatprep.subr.mxu0 0.0
        %1516 = vmatpush1.msra.mxu0 0.0
        %1517 = vmatprep.subr.mxu0 0.0
        %1518 = vmatpush1.msra.mxu0 0.0
        %1519 = vmatprep.subr.mxu0 0.0
        %1520 = vmatpush1.msra.mxu0 0.0
        %1521 = vmatprep.subr.mxu0 0.0
        %1522 = vmatpush1.msra.mxu0 0.0
        %1523 = vmatprep.subr.mxu0 0.0
        %1524 = vmatpush1.msra.mxu0 0.0
        %1525 = vmatprep.subr.mxu0 0.0
        %1526 = vmatpush1.msra.mxu0 0.0
        %1527 = vmatprep.subr.mxu0 0.0
        %1528 = vmatpush1.msra.mxu0 0.0
        %1529 = vmatprep.subr.mxu0 0.0
        %1530 = vmatpush1.msra.mxu0 0.0
        %1531 = vmatprep.subr.mxu0 0.0
        %1532 = vmatpush1.msra.mxu0 0.0
        %1533 = vmatprep.subr.mxu0 0.0
        %1534 = vmatpush1.msra.mxu0 0.0
        %1535 = vmatprep.subr.mxu0 0.0
        %1536 = vmatpush1.msra.mxu0 0.0
        %1537 = vmatprep.mubr.f32.mxu0 0.0
        %v1538 = vand.u32 %v1156, 4294901760
        %v1539 = vsub.f32 %v1156, %v1538
        %1540 = vmatmul.mubr.f32.gmra.mrb[0].mxu0 %v1539
        %v1541 = vpop.f32.mrb[0].mxu0
        %v1542 = vadd.f32 %v1426, %v1541
        %v1543 = vpop.f32.mrb[0].mxu0
        %1544 = vmatprep.mubr.f32.mxu0 0.0
        %v1545 = vand.u32 %v1159, 4294901760
        %v1546 = vsub.f32 %v1159, %v1545
        %1547 = vmatmul.mubr.f32.gmra.mrb[0].mxu0 %v1546
        %v1548 = vpop.f32.mrb[0].mxu0
        %v1549 = vadd.f32 %v1432, %v1548
        %v1550 = vpop.f32.mrb[0].mxu0
        %1551 = vmatprep.mubr.f32.mxu0 0.0
        %v1552 = vand.u32 %v1162, 4294901760
        %v1553 = vsub.f32 %v1162, %v1552
        %1554 = vmatmul.mubr.f32.gmra.mrb[0].mxu0 %v1553
        %v1555 = vpop.f32.mrb[0].mxu0
        %v1556 = vadd.f32 %v1438, %v1555
        %v1557 = vpop.f32.mrb[0].mxu0
        %1558 = vdwg.mxu0
        %1559 = vmatprep.subr.mxu0 0.0
        %v1560 = vand.u32 %v1138, 4294901760
        %1561 = vmatpush1.msra.mxu0 %v1560
        %1562 = vmatprep.subr.mxu0 0.0
        %v1563 = vand.u32 %v1139, 4294901760
        %1564 = vmatpush1.msra.mxu0 %v1563
        %1565 = vmatprep.subr.mxu0 0.0
        %v1566 = vand.u32 %v1140, 4294901760
        %1567 = vmatpush1.msra.mxu0 %v1566
        %1568 = vmatprep.subr.mxu0 0.0
        %v1569 = vand.u32 %v1141, 4294901760
        %1570 = vmatpush1.msra.mxu0 %v1569
        %1571 = vmatprep.subr.mxu0 0.0
        %v1572 = vand.u32 %v1142, 4294901760
        %1573 = vmatpush1.msra.mxu0 %v1572
        %1574 = vmatprep.subr.mxu0 0.0
        %v1575 = vand.u32 %v1143, 4294901760
        %1576 = vmatpush1.msra.mxu0 %v1575
        %1577 = vmatprep.subr.mxu0 0.0
        %v1578 = vand.u32 %v1144, 4294901760
        %1579 = vmatpush1.msra.mxu0 %v1578
        %1580 = vmatprep.subr.mxu0 0.0
        %v1581 = vand.u32 %v1145, 4294901760
        %1582 = vmatpush1.msra.mxu0 %v1581
        %1583 = vmatprep.subr.mxu0 0.0
        %v1584 = vand.u32 %v1146, 4294901760
        %1585 = vmatpush1.msra.mxu0 %v1584
        %1586 = vmatprep.subr.mxu0 0.0
        %v1587 = vand.u32 %v1147, 4294901760
        %1588 = vmatpush1.msra.mxu0 %v1587
        %1589 = vmatprep.subr.mxu0 0.0
        %v1590 = vand.u32 %v1148, 4294901760
        %1591 = vmatpush1.msra.mxu0 %v1590
        %1592 = vmatprep.subr.mxu0 0.0
        %v1593 = vand.u32 %v1149, 4294901760
        %1594 = vmatpush1.msra.mxu0 %v1593
        %1595 = vmatprep.subr.mxu0 0.0
        %v1596 = vand.u32 %v1150, 4294901760
        %1597 = vmatpush1.msra.mxu0 %v1596
        %1598 = vmatprep.subr.mxu0 0.0
        %v1599 = vand.u32 %v1151, 4294901760
        %1600 = vmatpush1.msra.mxu0 %v1599
        %1601 = vmatprep.subr.mxu0 0.0
        %v1602 = vand.u32 %v1152, 4294901760
        %1603 = vmatpush1.msra.mxu0 %v1602
        %1604 = vmatprep.subr.mxu0 0.0
        %v1605 = vand.u32 %v1165, 4294901760
        %1606 = vmatpush1.msra.mxu0 %v1605
        %1607 = vmatprep.subr.mxu0 0.0
        %1608 = vmatpush1.msra.mxu0 0.0
        %1609 = vmatprep.subr.mxu0 0.0
        %1610 = vmatpush1.msra.mxu0 0.0
        %1611 = vmatprep.subr.mxu0 0.0
        %1612 = vmatpush1.msra.mxu0 0.0
        %1613 = vmatprep.subr.mxu0 0.0
        %1614 = vmatpush1.msra.mxu0 0.0
        %1615 = vmatprep.subr.mxu0 0.0
        %1616 = vmatpush1.msra.mxu0 0.0
        %1617 = vmatprep.subr.mxu0 0.0
        %1618 = vmatpush1.msra.mxu0 0.0
        %1619 = vmatprep.subr.mxu0 0.0
        %1620 = vmatpush1.msra.mxu0 0.0
        %1621 = vmatprep.subr.mxu0 0.0
        %1622 = vmatpush1.msra.mxu0 0.0
        %1623 = vmatprep.subr.mxu0 0.0
        %1624 = vmatpush1.msra.mxu0 0.0
        %1625 = vmatprep.subr.mxu0 0.0
        %1626 = vmatpush1.msra.mxu0 0.0
        %1627 = vmatprep.subr.mxu0 0.0
        %1628 = vmatpush1.msra.mxu0 0.0
        %1629 = vmatprep.subr.mxu0 0.0
        %1630 = vmatpush1.msra.mxu0 0.0
        %1631 = vmatprep.subr.mxu0 0.0
        %1632 = vmatpush1.msra.mxu0 0.0
        %1633 = vmatprep.subr.mxu0 0.0
        %1634 = vmatpush1.msra.mxu0 0.0
        %1635 = vmatprep.subr.mxu0 0.0
        %1636 = vmatpush1.msra.mxu0 0.0
        %1637 = vmatprep.subr.mxu0 0.0
        %1638 = vmatpush1.msra.mxu0 0.0
        %1639 = vmatprep.mubr.f32.mxu0 0.0
        %v1640 = vand.u32 %v1156, 4294901760
        %v1641 = vsub.f32 %v1156, %v1640
        %v1642 = vand.u32 %v1641, 4294901760
        %1643 = vmatmul.mubr.f32.gmra.mrb[0].mxu0 %v1642
        %v1644 = vpop.f32.mrb[0].mxu0
        %v1645 = vadd.f32 %v1542, %v1644
        %v1646 = vpop.f32.mrb[0].mxu0
        %1647 = vmatprep.mubr.f32.mxu0 0.0
        %v1648 = vand.u32 %v1159, 4294901760
        %v1649 = vsub.f32 %v1159, %v1648
        %v1650 = vand.u32 %v1649, 4294901760
        %1651 = vmatmul.mubr.f32.gmra.mrb[0].mxu0 %v1650
        %v1652 = vpop.f32.mrb[0].mxu0
        %v1653 = vadd.f32 %v1549, %v1652
        %v1654 = vpop.f32.mrb[0].mxu0
        %1655 = vmatprep.mubr.f32.mxu0 0.0
        %v1656 = vand.u32 %v1162, 4294901760
        %v1657 = vsub.f32 %v1162, %v1656
        %v1658 = vand.u32 %v1657, 4294901760
        %1659 = vmatmul.mubr.f32.gmra.mrb[0].mxu0 %v1658
        %v1660 = vpop.f32.mrb[0].mxu0
        %v1661 = vadd.f32 %v1556, %v1660
        %v1662 = vpop.f32.mrb[0].mxu0
        %1663 = vdwg.mxu0
        %1664 = vmatprep.subr.mxu0 0.0
        %v1665 = vand.u32 %v1138, 4294901760
        %v1666 = vsub.f32 %v1138, %v1665
        %v1667 = vand.u32 %v1666, 4294901760
        %1668 = vmatpush1.msra.mxu0 %v1667
        %1669 = vmatprep.subr.mxu0 0.0
        %v1670 = vand.u32 %v1139, 4294901760
        %v1671 = vsub.f32 %v1139, %v1670
        %v1672 = vand.u32 %v1671, 4294901760
        %1673 = vmatpush1.msra.mxu0 %v1672
        %1674 = vmatprep.subr.mxu0 0.0
        %v1675 = vand.u32 %v1140, 4294901760
        %v1676 = vsub.f32 %v1140, %v1675
        %v1677 = vand.u32 %v1676, 4294901760
        %1678 = vmatpush1.msra.mxu0 %v1677
        %1679 = vmatprep.subr.mxu0 0.0
        %v1680 = vand.u32 %v1141, 4294901760
        %v1681 = vsub.f32 %v1141, %v1680
        %v1682 = vand.u32 %v1681, 4294901760
        %1683 = vmatpush1.msra.mxu0 %v1682
        %1684 = vmatprep.subr.mxu0 0.0
        %v1685 = vand.u32 %v1142, 4294901760
        %v1686 = vsub.f32 %v1142, %v1685
        %v1687 = vand.u32 %v1686, 4294901760
        %1688 = vmatpush1.msra.mxu0 %v1687
        %1689 = vmatprep.subr.mxu0 0.0
        %v1690 = vand.u32 %v1143, 4294901760
        %v1691 = vsub.f32 %v1143, %v1690
        %v1692 = vand.u32 %v1691, 4294901760
        %1693 = vmatpush1.msra.mxu0 %v1692
        %1694 = vmatprep.subr.mxu0 0.0
        %v1695 = vand.u32 %v1144, 4294901760
        %v1696 = vsub.f32 %v1144, %v1695
        %v1697 = vand.u32 %v1696, 4294901760
        %1698 = vmatpush1.msra.mxu0 %v1697
        %1699 = vmatprep.subr.mxu0 0.0
        %v1700 = vand.u32 %v1145, 4294901760
        %v1701 = vsub.f32 %v1145, %v1700
        %v1702 = vand.u32 %v1701, 4294901760
        %1703 = vmatpush1.msra.mxu0 %v1702
        %1704 = vmatprep.subr.mxu0 0.0
        %v1705 = vand.u32 %v1146, 4294901760
        %v1706 = vsub.f32 %v1146, %v1705
        %v1707 = vand.u32 %v1706, 4294901760
        %1708 = vmatpush1.msra.mxu0 %v1707
        %1709 = vmatprep.subr.mxu0 0.0
        %v1710 = vand.u32 %v1147, 4294901760
        %v1711 = vsub.f32 %v1147, %v1710
        %v1712 = vand.u32 %v1711, 4294901760
        %1713 = vmatpush1.msra.mxu0 %v1712
        %1714 = vmatprep.subr.mxu0 0.0
        %v1715 = vand.u32 %v1148, 4294901760
        %v1716 = vsub.f32 %v1148, %v1715
        %v1717 = vand.u32 %v1716, 4294901760
        %1718 = vmatpush1.msra.mxu0 %v1717
        %1719 = vmatprep.subr.mxu0 0.0
        %v1720 = vand.u32 %v1149, 4294901760
        %v1721 = vsub.f32 %v1149, %v1720
        %v1722 = vand.u32 %v1721, 4294901760
        %1723 = vmatpush1.msra.mxu0 %v1722
        %1724 = vmatprep.subr.mxu0 0.0
        %v1725 = vand.u32 %v1150, 4294901760
        %v1726 = vsub.f32 %v1150, %v1725
        %v1727 = vand.u32 %v1726, 4294901760
        %1728 = vmatpush1.msra.mxu0 %v1727
        %1729 = vmatprep.subr.mxu0 0.0
        %v1730 = vand.u32 %v1151, 4294901760
        %v1731 = vsub.f32 %v1151, %v1730
        %v1732 = vand.u32 %v1731, 4294901760
        %1733 = vmatpush1.msra.mxu0 %v1732
        %1734 = vmatprep.subr.mxu0 0.0
        %v1735 = vand.u32 %v1152, 4294901760
        %v1736 = vsub.f32 %v1152, %v1735
        %v1737 = vand.u32 %v1736, 4294901760
        %1738 = vmatpush1.msra.mxu0 %v1737
        %1739 = vmatprep.subr.mxu0 0.0
        %v1740 = vand.u32 %v1165, 4294901760
        %v1741 = vsub.f32 %v1165, %v1740
        %v1742 = vand.u32 %v1741, 4294901760
        %1743 = vmatpush1.msra.mxu0 %v1742
        %1744 = vmatprep.subr.mxu0 0.0
        %1745 = vmatpush1.msra.mxu0 0.0
        %1746 = vmatprep.subr.mxu0 0.0
        %1747 = vmatpush1.msra.mxu0 0.0
        %1748 = vmatprep.subr.mxu0 0.0
        %1749 = vmatpush1.msra.mxu0 0.0
        %1750 = vmatprep.subr.mxu0 0.0
        %1751 = vmatpush1.msra.mxu0 0.0
        %1752 = vmatprep.subr.mxu0 0.0
        %1753 = vmatpush1.msra.mxu0 0.0
        %1754 = vmatprep.subr.mxu0 0.0
        %1755 = vmatpush1.msra.mxu0 0.0
        %1756 = vmatprep.subr.mxu0 0.0
        %1757 = vmatpush1.msra.mxu0 0.0
        %1758 = vmatprep.subr.mxu0 0.0
        %1759 = vmatpush1.msra.mxu0 0.0
        %1760 = vmatprep.subr.mxu0 0.0
        %1761 = vmatpush1.msra.mxu0 0.0
        %1762 = vmatprep.subr.mxu0 0.0
        %1763 = vmatpush1.msra.mxu0 0.0
        %1764 = vmatprep.subr.mxu0 0.0
        %1765 = vmatpush1.msra.mxu0 0.0
        %1766 = vmatprep.subr.mxu0 0.0
        %1767 = vmatpush1.msra.mxu0 0.0
        %1768 = vmatprep.subr.mxu0 0.0
        %1769 = vmatpush1.msra.mxu0 0.0
        %1770 = vmatprep.subr.mxu0 0.0
        %1771 = vmatpush1.msra.mxu0 0.0
        %1772 = vmatprep.subr.mxu0 0.0
        %1773 = vmatpush1.msra.mxu0 0.0
        %1774 = vmatprep.subr.mxu0 0.0
        %1775 = vmatpush1.msra.mxu0 0.0
        %1776 = vmatprep.mubr.f32.mxu0 0.0
        %v1777 = vand.u32 %v1156, 4294901760
        %1778 = vmatmul.mubr.f32.gmra.mrb[0].mxu0 %v1777
        %v1779 = vpop.f32.mrb[0].mxu0
        %v1780 = vadd.f32 %v1645, %v1779
        %v1781 = vpop.f32.mrb[0].mxu0
        %1782 = vmatprep.mubr.f32.mxu0 0.0
        %v1783 = vand.u32 %v1159, 4294901760
        %1784 = vmatmul.mubr.f32.gmra.mrb[0].mxu0 %v1783
        %v1785 = vpop.f32.mrb[0].mxu0
        %v1786 = vadd.f32 %v1653, %v1785
        %v1787 = vpop.f32.mrb[0].mxu0
        %1788 = vmatprep.mubr.f32.mxu0 0.0
        %v1789 = vand.u32 %v1162, 4294901760
        %1790 = vmatmul.mubr.f32.gmra.mrb[0].mxu0 %v1789
        %v1791 = vpop.f32.mrb[0].mxu0
        %v1792 = vadd.f32 %v1661, %v1791
        %v1793 = vpop.f32.mrb[0].mxu0
        %1794 = vdwg.mxu0
        %1795 = vmatprep.subr.mxu0 0.0
        %v1796 = vand.u32 %v1138, 4294901760
        %1797 = vmatpush1.msra.mxu0 %v1796
        %1798 = vmatprep.subr.mxu0 0.0
        %v1799 = vand.u32 %v1139, 4294901760
        %1800 = vmatpush1.msra.mxu0 %v1799
        %1801 = vmatprep.subr.mxu0 0.0
        %v1802 = vand.u32 %v1140, 4294901760
        %1803 = vmatpush1.msra.mxu0 %v1802
        %1804 = vmatprep.subr.mxu0 0.0
        %v1805 = vand.u32 %v1141, 4294901760
        %1806 = vmatpush1.msra.mxu0 %v1805
        %1807 = vmatprep.subr.mxu0 0.0
        %v1808 = vand.u32 %v1142, 4294901760
        %1809 = vmatpush1.msra.mxu0 %v1808
        %1810 = vmatprep.subr.mxu0 0.0
        %v1811 = vand.u32 %v1143, 4294901760
        %1812 = vmatpush1.msra.mxu0 %v1811
        %1813 = vmatprep.subr.mxu0 0.0
        %v1814 = vand.u32 %v1144, 4294901760
        %1815 = vmatpush1.msra.mxu0 %v1814
        %1816 = vmatprep.subr.mxu0 0.0
        %v1817 = vand.u32 %v1145, 4294901760
        %1818 = vmatpush1.msra.mxu0 %v1817
        %1819 = vmatprep.subr.mxu0 0.0
        %v1820 = vand.u32 %v1146, 4294901760
        %1821 = vmatpush1.msra.mxu0 %v1820
        %1822 = vmatprep.subr.mxu0 0.0
        %v1823 = vand.u32 %v1147, 4294901760
        %1824 = vmatpush1.msra.mxu0 %v1823
        %1825 = vmatprep.subr.mxu0 0.0
        %v1826 = vand.u32 %v1148, 4294901760
        %1827 = vmatpush1.msra.mxu0 %v1826
        %1828 = vmatprep.subr.mxu0 0.0
        %v1829 = vand.u32 %v1149, 4294901760
        %1830 = vmatpush1.msra.mxu0 %v1829
        %1831 = vmatprep.subr.mxu0 0.0
        %v1832 = vand.u32 %v1150, 4294901760
        %1833 = vmatpush1.msra.mxu0 %v1832
        %1834 = vmatprep.subr.mxu0 0.0
        %v1835 = vand.u32 %v1151, 4294901760
        %1836 = vmatpush1.msra.mxu0 %v1835
        %1837 = vmatprep.subr.mxu0 0.0
        %v1838 = vand.u32 %v1152, 4294901760
        %1839 = vmatpush1.msra.mxu0 %v1838
        %1840 = vmatprep.subr.mxu0 0.0
        %v1841 = vand.u32 %v1165, 4294901760
        %1842 = vmatpush1.msra.mxu0 %v1841
        %1843 = vmatprep.subr.mxu0 0.0
        %1844 = vmatpush1.msra.mxu0 0.0
        %1845 = vmatprep.subr.mxu0 0.0
        %1846 = vmatpush1.msra.mxu0 0.0
        %1847 = vmatprep.subr.mxu0 0.0
        %1848 = vmatpush1.msra.mxu0 0.0
        %1849 = vmatprep.subr.mxu0 0.0
        %1850 = vmatpush1.msra.mxu0 0.0
        %1851 = vmatprep.subr.mxu0 0.0
        %1852 = vmatpush1.msra.mxu0 0.0
        %1853 = vmatprep.subr.mxu0 0.0
        %1854 = vmatpush1.msra.mxu0 0.0
        %1855 = vmatprep.subr.mxu0 0.0
        %1856 = vmatpush1.msra.mxu0 0.0
        %1857 = vmatprep.subr.mxu0 0.0
        %1858 = vmatpush1.msra.mxu0 0.0
        %1859 = vmatprep.subr.mxu0 0.0
        %1860 = vmatpush1.msra.mxu0 0.0
        %1861 = vmatprep.subr.mxu0 0.0
        %1862 = vmatpush1.msra.mxu0 0.0
        %1863 = vmatprep.subr.mxu0 0.0
        %1864 = vmatpush1.msra.mxu0 0.0
        %1865 = vmatprep.subr.mxu0 0.0
        %1866 = vmatpush1.msra.mxu0 0.0
        %1867 = vmatprep.subr.mxu0 0.0
        %1868 = vmatpush1.msra.mxu0 0.0
        %1869 = vmatprep.subr.mxu0 0.0
        %1870 = vmatpush1.msra.mxu0 0.0
        %1871 = vmatprep.subr.mxu0 0.0
        %1872 = vmatpush1.msra.mxu0 0.0
        %1873 = vmatprep.subr.mxu0 0.0
        %1874 = vmatpush1.msra.mxu0 0.0
        %1875 = vmatprep.mubr.f32.mxu0 0.0
        %v1876 = vand.u32 %v1156, 4294901760
        %1877 = vmatmul.mubr.f32.gmra.mrb[0].mxu0 %v1876
        %v1878 = vpop.f32.mrb[0].mxu0
        %v1879 = vadd.f32 %v1780, %v1878
        %v1880 = vpop.f32.mrb[0].mxu0
        %1881 = vmatprep.mubr.f32.mxu0 0.0
        %v1882 = vand.u32 %v1159, 4294901760
        %1883 = vmatmul.mubr.f32.gmra.mrb[0].mxu0 %v1882
        %v1884 = vpop.f32.mrb[0].mxu0
        %v1885 = vadd.f32 %v1786, %v1884
        %v1886 = vpop.f32.mrb[0].mxu0
        %1887 = vmatprep.mubr.f32.mxu0 0.0
        %v1888 = vand.u32 %v1162, 4294901760
        %1889 = vmatmul.mubr.f32.gmra.mrb[0].mxu0 %v1888
        %v1890 = vpop.f32.mrb[0].mxu0
        %v1891 = vadd.f32 %v1792, %v1890
        %v1892 = vpop.f32.mrb[0].mxu0
        %1893 = vdwg.mxu0
        %vm1894 = vcmask 539648
        %1895 = vst.msk [vmem:[%s239] sm:$0xff] %vm1894, %v1879
        %1896 = vst.msk [vmem:[%s239 + $0x8] sm:$0xff] %vm1894, %v1885
        %vm1897 = vcmask 533504
        %1898 = vst.msk [vmem:[%s239 + $0x10] sm:$0x3] %vm1897, %v1891
        %p1899 = scmp.lt.s32.totalorder %s18, 1
        %s1900 = scalar_select %p1899, %s18, 1
        %s1901 = smul.addr %s1900, 3
        %s1902 = smul.addr %s1901, 8
        %s1903 = scalar_lea.vmem %s5, %s1902
        // Predicated region
        $region45: #{tpu_custom_call.1} parent=39 // pred_check
          %p1904 = pneg %p146
        $region46: #{tpu_custom_call.1} parent=39 // pred_check_branch
          %1906 = sbr.rel (%p1904) target = $region48
        $region47: #{tpu_custom_call.1} parent=39 // pred_region
          _
        $region48: #{tpu_custom_call.1} parent=39 // pred_fallthru
          _
      $region40: #{tpu_custom_call.1} parent=5 // pred_fallthru
        _
      %p1907 = scmp.le.s32.totalorder 2, %s13
      // Predicated region
      $region49: #{tpu_custom_call.1} parent=5 // pred_check
        %p1908 = pneg %p1907
      $region50: #{tpu_custom_call.1} parent=5 // pred_check_branch
        %1910 = sbr.rel (%p1908) target = $region52
      $region51: #{tpu_custom_call.1} parent=5 // pred_region
        %s1911 = ssub.s32 %s13, 2
        // Predicated region
        $region53: #{tpu_custom_call.1} parent=51 // pred_check
          %p1912 = pneg %p152
        $region54: #{tpu_custom_call.1} parent=51 // pred_check_branch
          %1914 = sbr.rel (%p1912) target = $region56
        $region55: #{tpu_custom_call.1} parent=51 // pred_region
          %p1915 = scmp.lt.s32.totalorder %s19, 1
          %s1916 = scalar_select %p1915, %s19, 1
          %s1917 = smul.addr %s1916, 3
          %s1918 = smul.addr %s1917, 8
          %s1919 = scalar_lea.vmem %s5, %s1918
        $region56: #{tpu_custom_call.1} parent=51 // pred_fallthru
          _
      $region52: #{tpu_custom_call.1} parent=5 // pred_fallthru
        _
    $region6: #{tpu_custom_call.1} parent=1 // loop_footer
      %s17 = sadd.s32 1, %s13
    $region7: #{tpu_custom_call.1} parent=1 // loop_footer_branch
      %12 = sbr.rel target = $region3
    $region8: #{tpu_custom_call.1} parent=1 // loop_exit
      _
    %1920 = vsyncpa [#allocation4], 1
    %s1921 = scalar_lea.sflag [#allocation4], 1
    %1922 = vsyncpa %s1921, 1

</llo_original>
